<compile_context>
chip_gen: v5e
topology: v5e:2x2
jax: 0.10.0
libtpu: 0.0.40
codegen_flags: <defaults>
</compile_context>

<pallas_src>
import jax
import jax.numpy as jnp
from jax.experimental import pallas as pl
from jax.experimental.pallas import tpu as pltpu

H = W = 28                  # spatial size implied by Linear(784, 10): 1*28*28
KH = KW = 3
IN_FEATURES = H * W         # 784
F_PAD = 896                 # 7*128: lane-aligned padded feature/reduction dim
OUT_FEATURES = 10
OUT_PAD = 128               # lane-dense padded output width
B_TILE = 512                # images per grid step


# --------------------------- fused kernel -----------------------------------
def fused_kernel(cb_ref, x_ref, band_ref, w_ref, bl_ref, o_ref):
    """conv3x3(pad=1) + ReLU + flatten + Linear for one batch tile.

    cb_ref   : (1,)           SMEM f32  conv bias
    x_ref    : (bt, 896)      VMEM bf16 flattened, zero-padded input images
    band_ref : (896, 896)     VMEM bf16 block-tridiagonal conv band matrix
    w_ref    : (896, 128)     VMEM bf16 linear weight (rows/cols zero padded)
    bl_ref   : (1, 128)       VMEM f32  linear bias (padded to 128 lanes)
    o_ref    : (bt, 128)      VMEM f32  output tile (cols 10..127 are padding)
    """
    # 3x3 conv (zero padding folded into the band matrix) as one big MXU matmul.
    conv = jnp.dot(x_ref[...], band_ref[...], preferred_element_type=jnp.float32)
    # Bias + ReLU once, in f32 on the VPU.
    act = jnp.maximum(conv + cb_ref[0], 0.0).astype(jnp.bfloat16)
    # Flatten + Linear as a single full-K MXU matmul; padded cols hit zero weight rows.
    out = jnp.dot(act, w_ref[...], preferred_element_type=jnp.float32)
    o_ref[...] = out + bl_ref[...]


# --------------------------- wrapper helpers ---------------------------------
def _conv_band(conv_w):
    """Fold 3x3 conv weights + zero padding into a (784, 784) band matrix.

    band[r*28+c, i*28+j] = conv_w[r-i+1, c-j+1] when the tap is in range, else 0,
    so conv_flat = x_flat @ band reproduces Conv2d(1,1,3,stride=1,padding=1).
    """
    eyes = [jnp.eye(W, k=1 - d, dtype=jnp.float32) for d in range(KH)]
    band = sum(conv_w[di, dj] * jnp.kron(eyes[di], eyes[dj])
               for di in range(KH) for dj in range(KW))
    return band


def _choose_bt(n):
    """Batch tile: big enough to amortize step overhead, >=2 tiles when possible."""
    if n >= 2 * B_TILE:
        return B_TILE
    half = pl.cdiv(n, 2)
    return max(8, min(B_TILE, pl.cdiv(half, 8) * 8))


def my_model_forward(x_nchw, params):
    """x_nchw: (N, 1, 28, 28) f32 -> (N, 10) f32 (Conv2d -> ReLU -> reshape -> Linear)."""
    n = x_nchw.shape[0]
    # flatten is free (contiguous NCHW, C == 1); cast operands to bf16 for the MXU
    x_flat = x_nchw.reshape(n, IN_FEATURES).astype(jnp.bfloat16)
    x_flat = jnp.pad(x_flat, ((0, 0), (0, F_PAD - IN_FEATURES)))

    bt = _choose_bt(n)
    n_pad = pl.cdiv(n, bt) * bt
    if n_pad != n:                                  # only the ragged tail is padded
        x_flat = jnp.pad(x_flat, ((0, n_pad - n), (0, 0)))

    band = jnp.pad(_conv_band(params["conv_w"]),
                   ((0, F_PAD - IN_FEATURES), (0, F_PAD - IN_FEATURES)))
    band = band.astype(jnp.bfloat16)                                     # (896, 896)
    w = jnp.pad(params["lin_w"].T,
                ((0, F_PAD - IN_FEATURES), (0, OUT_PAD - OUT_FEATURES)))
    w = w.astype(jnp.bfloat16)                                           # (896, 128)
    bl = jnp.pad(params["lin_b"], (0, OUT_PAD - OUT_FEATURES)).reshape(1, OUT_PAD)

    cost = pl.CostEstimate(
        flops=2 * n_pad * F_PAD * (F_PAD + OUT_PAD),
        transcendentals=0,
        bytes_accessed=(n_pad * F_PAD * 2 + F_PAD * F_PAD * 2
                        + F_PAD * OUT_PAD * 2 + n_pad * OUT_PAD * 4),
    )

    out = pl.pallas_call(
        fused_kernel,
        out_shape=jax.ShapeDtypeStruct((n_pad, OUT_PAD), jnp.float32),
        grid_spec=pltpu.PrefetchScalarGridSpec(
            num_scalar_prefetch=0,
            grid=(n_pad // bt,),
            in_specs=[
                pl.BlockSpec(memory_space=pltpu.MemorySpace.SMEM),    # conv bias
                pl.BlockSpec((bt, F_PAD), lambda i: (i, 0)),          # input tile
                pl.BlockSpec((F_PAD, F_PAD), lambda i: (0, 0)),       # band (resident)
                pl.BlockSpec((F_PAD, OUT_PAD), lambda i: (0, 0)),     # linear W (resident)
                pl.BlockSpec((1, OUT_PAD), lambda i: (0, 0)),         # linear b (resident)
            ],
            out_specs=pl.BlockSpec((bt, OUT_PAD), lambda i: (i, 0)),
        ),
        compiler_params=pltpu.CompilerParams(
            dimension_semantics=("parallel",),      # megacore / v7x: shard batch tiles
        ),
        cost_estimate=cost,
    )(params["conv_b"], x_flat, band, w, bl)

    return out[:n, :OUT_FEATURES]


def init_params(key):
    k1, k2, k3, k4 = jax.random.split(key, 4)
    # deterministic synthetic init (shapes match nn.Conv2d(1,1,3) / nn.Linear(784,10))
    conv_w = jax.random.uniform(k1, (KH, KW), jnp.float32, -1.0 / 3.0, 1.0 / 3.0)
    conv_b = jax.random.uniform(k2, (1,), jnp.float32, -1.0 / 3.0, 1.0 / 3.0)
    bound = 1.0 / jnp.sqrt(IN_FEATURES)
    lin_w = jax.random.uniform(k3, (OUT_FEATURES, IN_FEATURES), jnp.float32, -bound, bound)
    lin_b = jax.random.uniform(k4, (OUT_FEATURES,), jnp.float32, -bound, bound)
    return {"conv_w": conv_w, "conv_b": conv_b, "lin_w": lin_w, "lin_b": lin_b}


# --------------------------- reference + smoke test ---------------------------
def _reference(x_nchw, p):
    n = x_nchw.shape[0]
    xp = jnp.pad(x_nchw.reshape(n, H, W), ((0, 0), (1, 1), (1, 1)))
    conv = sum(p["conv_w"][di, dj] * xp[:, di:di + H, dj:dj + W]
               for di in range(KH) for dj in range(KW)) + p["conv_b"][0]
    act = jnp.maximum(conv, 0.0).reshape(n, IN_FEATURES)
    return act @ p["lin_w"].T + p["lin_b"]


if __name__ == "__main__":
    key = jax.random.PRNGKey(0)
    pkey, xkey = jax.random.split(key)
    params = init_params(pkey)
    fwd = jax.jit(my_model_forward)

    # small batch (single tile)
    x = jax.random.normal(xkey, (2, 1, H, W), jnp.float32)
    out = jax.block_until_ready(fwd(x, params))
    assert out.shape == (2, OUT_FEATURES), out.shape
    ref = _reference(x, params)
    # tolerance sized for bf16 MXU operands (f32 accumulation); observed error is
    # typically far smaller.
    assert jnp.allclose(out, ref, atol=4e-2, rtol=4e-2), \
        float(jnp.max(jnp.abs(out - ref)))

    # larger, non-multiple-of-tile batch: exercises multi-step grid + tail padding
    x2 = jax.random.normal(jax.random.PRNGKey(1), (130, 1, H, W), jnp.float32)
    out2 = jax.block_until_ready(fwd(x2, params))
    assert out2.shape == (130, OUT_FEATURES), out2.shape
    ref2 = _reference(x2, params)
    assert jnp.allclose(out2, ref2, atol=4e-2, rtol=4e-2), \
        float(jnp.max(jnp.abs(out2 - ref2)))

    print("KERNEL_OK")
</pallas_src>

<mosaic_0001>
module attributes {stable_mosaic.version = 11 : i64} {
  func.func @fused_kernel(%arg0: i32, %arg1: memref<1xf32, #tpu.memory_space<smem>>, %arg2: memref<8x896xbf16, #tpu.memory_space<vmem>>, %arg3: memref<896x896xbf16, #tpu.memory_space<vmem>>, %arg4: memref<896x128xbf16, #tpu.memory_space<vmem>>, %arg5: memref<1x128xf32, #tpu.memory_space<vmem>>, %arg6: memref<8x128xf32, #tpu.memory_space<vmem>>) attributes {dimension_semantics = [#tpu.dimension_semantics<parallel>], iteration_bounds = array<i64: 1>, scalar_prefetch = 0 : i64, scratch_operands = 0 : i64, tpu.core_type = #tpu.core_type<tc>, window_params = [{transform_indices = @transform_0, window_bounds = array<i64: 1>}, {transform_indices = @transform_1, window_bounds = array<i64: 8, 896>}, {pipeline_mode = #tpu.pipeline_mode<synchronous>, transform_indices = @transform_2, window_bounds = array<i64: 896, 896>}, {pipeline_mode = #tpu.pipeline_mode<synchronous>, transform_indices = @transform_3, window_bounds = array<i64: 896, 128>}, {pipeline_mode = #tpu.pipeline_mode<synchronous>, transform_indices = @transform_4, window_bounds = array<i64: 1, 128>}, {transform_indices = @transform_5, window_bounds = array<i64: 8, 128>}]} {
    %c0 = arith.constant 0 : index
    %c0_0 = arith.constant 0 : index
    %0 = vector.load %arg2[%c0, %c0_0] : memref<8x896xbf16, #tpu.memory_space<vmem>>, vector<8x896xbf16>
    %c0_1 = arith.constant 0 : index
    %c0_2 = arith.constant 0 : index
    %1 = vector.load %arg3[%c0_1, %c0_2] : memref<896x896xbf16, #tpu.memory_space<vmem>>, vector<896x896xbf16>
    %cst = arith.constant dense<0.000000e+00> : vector<8x896xf32>
    %2 = tpu.matmul %0, %1, %cst {dimension_numbers = #tpu.dot_dimension_numbers<[1], [0], [0], [1], [0, 0, 1, 1], [], []>} : vector<8x896xbf16>, vector<896x896xbf16>, vector<8x896xf32> -> vector<8x896xf32>
    %c0_3 = arith.constant 0 : index
    %3 = memref.load %arg1[%c0_3] : memref<1xf32, #tpu.memory_space<smem>>
    %4 = vector.broadcast %3 : f32 to vector<8x896xf32>
    %5 = arith.addf %2, %4 : vector<8x896xf32>
    %cst_4 = arith.constant 0.000000e+00 : f32
    %6 = vector.broadcast %cst_4 : f32 to vector<8x896xf32>
    %7 = arith.maximumf %5, %6 : vector<8x896xf32>
    %8 = arith.truncf %7 : vector<8x896xf32> to vector<8x896xbf16>
    %c0_5 = arith.constant 0 : index
    %c0_6 = arith.constant 0 : index
    %9 = vector.load %arg4[%c0_5, %c0_6] : memref<896x128xbf16, #tpu.memory_space<vmem>>, vector<896x128xbf16>
    %cst_7 = arith.constant dense<0.000000e+00> : vector<8x128xf32>
    %10 = tpu.matmul %8, %9, %cst_7 {dimension_numbers = #tpu.dot_dimension_numbers<[1], [0], [0], [1], [0, 0, 1, 1], [], []>} : vector<8x896xbf16>, vector<896x128xbf16>, vector<8x128xf32> -> vector<8x128xf32>
    %c0_8 = arith.constant 0 : index
    %c0_9 = arith.constant 0 : index
    %11 = vector.load %arg5[%c0_8, %c0_9] : memref<1x128xf32, #tpu.memory_space<vmem>>, vector<1x128xf32>
    %12 = vector.broadcast %11 : vector<1x128xf32> to vector<8x128xf32>
    %13 = arith.addf %10, %12 : vector<8x128xf32>
    %c0_10 = arith.constant 0 : index
    %c0_11 = arith.constant 0 : index
    %14 = vector.load %arg6[%c0_10, %c0_11] : memref<8x128xf32, #tpu.memory_space<vmem>>, vector<8x128xf32>
    tpu.vector_store %arg6[%c0_10, %c0_11], %13 {strides = array<i32>} : memref<8x128xf32, #tpu.memory_space<vmem>>, vector<8x128xf32>,
    return
  }
  func.func @transform_0(%arg0: i32) -> i32 {
    %c0_i32 = arith.constant 0 : i32
    %c0_i32_0 = arith.constant 0 : i32
    return %c0_i32 : i32
  }
  func.func @transform_1(%arg0: i32) -> (i32, i32) {
    %c0_i32 = arith.constant 0 : i32
    %c0_i32_0 = arith.constant 0 : i32
    return %arg0, %c0_i32 : i32, i32
  }
  func.func @transform_2(%arg0: i32) -> (i32, i32) {
    %c0_i32 = arith.constant 0 : i32
    %c0_i32_0 = arith.constant 0 : i32
    %c0_i32_1 = arith.constant 0 : i32
    return %c0_i32, %c0_i32_0 : i32, i32
  }
  func.func @transform_3(%arg0: i32) -> (i32, i32) {
    %c0_i32 = arith.constant 0 : i32
    %c0_i32_0 = arith.constant 0 : i32
    %c0_i32_1 = arith.constant 0 : i32
    return %c0_i32, %c0_i32_0 : i32, i32
  }
  func.func @transform_4(%arg0: i32) -> (i32, i32) {
    %c0_i32 = arith.constant 0 : i32
    %c0_i32_0 = arith.constant 0 : i32
    %c0_i32_1 = arith.constant 0 : i32
    return %c0_i32, %c0_i32_0 : i32, i32
  }
  func.func @transform_5(%arg0: i32) -> (i32, i32) {
    %c0_i32 = arith.constant 0 : i32
    %c0_i32_0 = arith.constant 0 : i32
    return %arg0, %c0_i32 : i32, i32
  }
}

</mosaic_0001>

<llo_original>
// kernel: my_model_forward.1
$region0: #{my_model_forward.1}
  #allocation0 [shape = 'u32[]', space=smem, size = 0x4, offset = 0x4, fixed_abs, tag = 'smem constant byte address 0x4 - core index']
  #allocation1 [shape = 'u32[72,128]{1,0:T(1,128)}', space=vmem, size = 0x9000, scoped, tag = 'internal scratch']
  #allocation2 [shape = 'f32[1]{0:T(128)S(6)}', space=smem, size = 0x200, scoped, tag = 'scoped memory for my_model_forward.1']
  %s0 = inlined_call_operand.<no memory space> [shape: f32[1], index: 0, kind: input, shape index: {}]
  %s1 = inlined_call_operand.vmem [shape: bf16[8,896], index: 1, kind: input, shape index: {}]
  %s2 = inlined_call_operand.vmem [shape: bf16[896,896], index: 2, kind: input, shape index: {}]
  %s3 = inlined_call_operand.vmem [shape: bf16[896,128], index: 3, kind: input, shape index: {}]
  %s4 = inlined_call_operand.vmem [shape: f32[1,128], index: 4, kind: input, shape index: {}]
  %s5 = inlined_call_operand.vmem [shape: f32[8,128], index: 5, kind: output, shape index: {}]
  %s6 = sld [smem:[#allocation0]]
  $region30: #{my_model_forward.1} parent=0
    _
  %s8 = ssub.s32 1, %s6
  %s9 = scalar_select 0, %s8, %s6
  %10 = sst [smem:[#allocation2]] %s0
  // Predicated region
  $region2: #{my_model_forward.1} parent=0 // pred_check
    _
  $region3: #{my_model_forward.1} parent=0 // pred_check_branch
    %12 = sbr.rel (0) target = $region5
  $region4: #{my_model_forward.1} parent=0 // pred_region
    _
  $region5: #{my_model_forward.1} parent=0 // pred_fallthru
    _
  // Predicated region
  $region6: #{my_model_forward.1} parent=0 // pred_check
    _
  $region7: #{my_model_forward.1} parent=0 // pred_check_branch
    %14 = sbr.rel (0) target = $region9
  $region8: #{my_model_forward.1} parent=0 // pred_region
    _
  $region9: #{my_model_forward.1} parent=0 // pred_fallthru
    _
  // Predicated region
  $region10: #{my_model_forward.1} parent=0 // pred_check
    _
  $region11: #{my_model_forward.1} parent=0 // pred_check_branch
    %16 = sbr.rel (0) target = $region13
  $region12: #{my_model_forward.1} parent=0 // pred_region
    _
  $region13: #{my_model_forward.1} parent=0 // pred_fallthru
    _
  // Predicated region
  $region14: #{my_model_forward.1} parent=0 // pred_check
    _
  $region15: #{my_model_forward.1} parent=0 // pred_check_branch
    %18 = sbr.rel (0) target = $region17
  $region16: #{my_model_forward.1} parent=0 // pred_region
    _
  $region17: #{my_model_forward.1} parent=0 // pred_fallthru
    _
  // Predicated region
  $region18: #{my_model_forward.1} parent=0 // pred_check
    _
  $region19: #{my_model_forward.1} parent=0 // pred_check_branch
    %20 = sbr.rel (0) target = $region21
  $region20: #{my_model_forward.1} parent=0 // pred_region
    _
  $region21: #{my_model_forward.1} parent=0 // pred_fallthru
    _
  %v21 = vld [vmem:[%s1] sm:$0xff]
  %v22 = vld [vmem:[%s1 + $0x8] sm:$0xff]
  %v23 = vld [vmem:[%s1 + $0x10] sm:$0xff]
  %v24 = vld [vmem:[%s1 + $0x18] sm:$0xf]
  %v25 = vld [vmem:[%s2] sm:$0xff]
  %v26 = vld [vmem:[%s2 + $0x8] sm:$0xff]
  %v27 = vld [vmem:[%s2 + $0x10] sm:$0xff]
  %v28 = vld [vmem:[%s2 + $0x18] sm:$0xf]
  %v29 = vld [vmem:[%s2 + $0x1c] sm:$0xff]
  %v30 = vld [vmem:[%s2 + $0x24] sm:$0xff]
  %v31 = vld [vmem:[%s2 + $0x2c] sm:$0xff]
  %v32 = vld [vmem:[%s2 + $0x34] sm:$0xf]
  %v33 = vld [vmem:[%s2 + $0x38] sm:$0xff]
  %v34 = vld [vmem:[%s2 + $0x40] sm:$0xff]
  %v35 = vld [vmem:[%s2 + $0x48] sm:$0xff]
  %v36 = vld [vmem:[%s2 + $0x50] sm:$0xf]
  %v37 = vld [vmem:[%s2 + $0x54] sm:$0xff]
  %v38 = vld [vmem:[%s2 + $0x5c] sm:$0xff]
  %v39 = vld [vmem:[%s2 + $0x64] sm:$0xff]
  %v40 = vld [vmem:[%s2 + $0x6c] sm:$0xf]
  %v41 = vld [vmem:[%s2 + $0x70] sm:$0xff]
  %v42 = vld [vmem:[%s2 + $0x78] sm:$0xff]
  %v43 = vld [vmem:[%s2 + $0x80] sm:$0xff]
  %v44 = vld [vmem:[%s2 + $0x88] sm:$0xf]
  %v45 = vld [vmem:[%s2 + $0x8c] sm:$0xff]
  %v46 = vld [vmem:[%s2 + $0x94] sm:$0xff]
  %v47 = vld [vmem:[%s2 + $0x9c] sm:$0xff]
  %v48 = vld [vmem:[%s2 + $0xa4] sm:$0xf]
  %v49 = vld [vmem:[%s2 + $0xa8] sm:$0xff]
  %v50 = vld [vmem:[%s2 + $0xb0] sm:$0xff]
  %v51 = vld [vmem:[%s2 + $0xb8] sm:$0xff]
  %v52 = vld [vmem:[%s2 + $0xc0] sm:$0xf]
  %v53 = vld [vmem:[%s2 + $0xc4] sm:$0xff]
  %v54 = vld [vmem:[%s2 + $0xcc] sm:$0xff]
  %v55 = vld [vmem:[%s2 + $0xd4] sm:$0xff]
  %v56 = vld [vmem:[%s2 + $0xdc] sm:$0xf]
  %v57 = vld [vmem:[%s2 + $0xe0] sm:$0xff]
  %v58 = vld [vmem:[%s2 + $0xe8] sm:$0xff]
  %v59 = vld [vmem:[%s2 + $0xf0] sm:$0xff]
  %v60 = vld [vmem:[%s2 + $0xf8] sm:$0xf]
  %v61 = vld [vmem:[%s2 + $0xfc] sm:$0xff]
  %v62 = vld [vmem:[%s2 + $0x104] sm:$0xff]
  %v63 = vld [vmem:[%s2 + $0x10c] sm:$0xff]
  %v64 = vld [vmem:[%s2 + $0x114] sm:$0xf]
  %v65 = vld [vmem:[%s2 + $0x118] sm:$0xff]
  %v66 = vld [vmem:[%s2 + $0x120] sm:$0xff]
  %v67 = vld [vmem:[%s2 + $0x128] sm:$0xff]
  %v68 = vld [vmem:[%s2 + $0x130] sm:$0xf]
  %v69 = vld [vmem:[%s2 + $0x134] sm:$0xff]
  %v70 = vld [vmem:[%s2 + $0x13c] sm:$0xff]
  %v71 = vld [vmem:[%s2 + $0x144] sm:$0xff]
  %v72 = vld [vmem:[%s2 + $0x14c] sm:$0xf]
  %v73 = vld [vmem:[%s2 + $0x150] sm:$0xff]
  %v74 = vld [vmem:[%s2 + $0x158] sm:$0xff]
  %v75 = vld [vmem:[%s2 + $0x160] sm:$0xff]
  %v76 = vld [vmem:[%s2 + $0x168] sm:$0xf]
  %v77 = vld [vmem:[%s2 + $0x16c] sm:$0xff]
  %v78 = vld [vmem:[%s2 + $0x174] sm:$0xff]
  %v79 = vld [vmem:[%s2 + $0x17c] sm:$0xff]
  %v80 = vld [vmem:[%s2 + $0x184] sm:$0xf]
  %v81 = vld [vmem:[%s2 + $0x188] sm:$0xff]
  %v82 = vld [vmem:[%s2 + $0x190] sm:$0xff]
  %v83 = vld [vmem:[%s2 + $0x198] sm:$0xff]
  %v84 = vld [vmem:[%s2 + $0x1a0] sm:$0xf]
  %v85 = vld [vmem:[%s2 + $0x1a4] sm:$0xff]
  %v86 = vld [vmem:[%s2 + $0x1ac] sm:$0xff]
  %v87 = vld [vmem:[%s2 + $0x1b4] sm:$0xff]
  %v88 = vld [vmem:[%s2 + $0x1bc] sm:$0xf]
  %v89 = vld [vmem:[%s2 + $0x1c0] sm:$0xff]
  %v90 = vld [vmem:[%s2 + $0x1c8] sm:$0xff]
  %v91 = vld [vmem:[%s2 + $0x1d0] sm:$0xff]
  %v92 = vld [vmem:[%s2 + $0x1d8] sm:$0xf]
  %v93 = vld [vmem:[%s2 + $0x1dc] sm:$0xff]
  %v94 = vld [vmem:[%s2 + $0x1e4] sm:$0xff]
  %v95 = vld [vmem:[%s2 + $0x1ec] sm:$0xff]
  %v96 = vld [vmem:[%s2 + $0x1f4] sm:$0xf]
  %v97 = vld [vmem:[%s2 + $0x1f8] sm:$0xff]
  %v98 = vld [vmem:[%s2 + $0x200] sm:$0xff]
  %v99 = vld [vmem:[%s2 + $0x208] sm:$0xff]
  %v100 = vld [vmem:[%s2 + $0x210] sm:$0xf]
  %v101 = vld [vmem:[%s2 + $0x214] sm:$0xff]
  %v102 = vld [vmem:[%s2 + $0x21c] sm:$0xff]
  %v103 = vld [vmem:[%s2 + $0x224] sm:$0xff]
  %v104 = vld [vmem:[%s2 + $0x22c] sm:$0xf]
  %v105 = vld [vmem:[%s2 + $0x230] sm:$0xff]
  %v106 = vld [vmem:[%s2 + $0x238] sm:$0xff]
  %v107 = vld [vmem:[%s2 + $0x240] sm:$0xff]
  %v108 = vld [vmem:[%s2 + $0x248] sm:$0xf]
  %v109 = vld [vmem:[%s2 + $0x24c] sm:$0xff]
  %v110 = vld [vmem:[%s2 + $0x254] sm:$0xff]
  %v111 = vld [vmem:[%s2 + $0x25c] sm:$0xff]
  %v112 = vld [vmem:[%s2 + $0x264] sm:$0xf]
  %v113 = vld [vmem:[%s2 + $0x268] sm:$0xff]
  %v114 = vld [vmem:[%s2 + $0x270] sm:$0xff]
  %v115 = vld [vmem:[%s2 + $0x278] sm:$0xff]
  %v116 = vld [vmem:[%s2 + $0x280] sm:$0xf]
  %v117 = vld [vmem:[%s2 + $0x284] sm:$0xff]
  %v118 = vld [vmem:[%s2 + $0x28c] sm:$0xff]
  %v119 = vld [vmem:[%s2 + $0x294] sm:$0xff]
  %v120 = vld [vmem:[%s2 + $0x29c] sm:$0xf]
  %v121 = vld [vmem:[%s2 + $0x2a0] sm:$0xff]
  %v122 = vld [vmem:[%s2 + $0x2a8] sm:$0xff]
  %v123 = vld [vmem:[%s2 + $0x2b0] sm:$0xff]
  %v124 = vld [vmem:[%s2 + $0x2b8] sm:$0xf]
  %v125 = vld [vmem:[%s2 + $0x2bc] sm:$0xff]
  %v126 = vld [vmem:[%s2 + $0x2c4] sm:$0xff]
  %v127 = vld [vmem:[%s2 + $0x2cc] sm:$0xff]
  %v128 = vld [vmem:[%s2 + $0x2d4] sm:$0xf]
  %v129 = vld [vmem:[%s2 + $0x2d8] sm:$0xff]
  %v130 = vld [vmem:[%s2 + $0x2e0] sm:$0xff]
  %v131 = vld [vmem:[%s2 + $0x2e8] sm:$0xff]
  %v132 = vld [vmem:[%s2 + $0x2f0] sm:$0xf]
  %v133 = vld [vmem:[%s2 + $0x2f4] sm:$0xff]
  %v134 = vld [vmem:[%s2 + $0x2fc] sm:$0xff]
  %v135 = vld [vmem:[%s2 + $0x304] sm:$0xff]
  %v136 = vld [vmem:[%s2 + $0x30c] sm:$0xf]
  %v137 = vld [vmem:[%s2 + $0x310] sm:$0xff]
  %v138 = vld [vmem:[%s2 + $0x318] sm:$0xff]
  %v139 = vld [vmem:[%s2 + $0x320] sm:$0xff]
  %v140 = vld [vmem:[%s2 + $0x328] sm:$0xf]
  %v141 = vld [vmem:[%s2 + $0x32c] sm:$0xff]
  %v142 = vld [vmem:[%s2 + $0x334] sm:$0xff]
  %v143 = vld [vmem:[%s2 + $0x33c] sm:$0xff]
  %v144 = vld [vmem:[%s2 + $0x344] sm:$0xf]
  %v145 = vld [vmem:[%s2 + $0x348] sm:$0xff]
  %v146 = vld [vmem:[%s2 + $0x350] sm:$0xff]
  %v147 = vld [vmem:[%s2 + $0x358] sm:$0xff]
  %v148 = vld [vmem:[%s2 + $0x360] sm:$0xf]
  %v149 = vld [vmem:[%s2 + $0x364] sm:$0xff]
  %v150 = vld [vmem:[%s2 + $0x36c] sm:$0xff]
  %v151 = vld [vmem:[%s2 + $0x374] sm:$0xff]
  %v152 = vld [vmem:[%s2 + $0x37c] sm:$0xf]
  %v153 = vld [vmem:[%s2 + $0x380] sm:$0xff]
  %v154 = vld [vmem:[%s2 + $0x388] sm:$0xff]
  %v155 = vld [vmem:[%s2 + $0x390] sm:$0xff]
  %v156 = vld [vmem:[%s2 + $0x398] sm:$0xf]
  %v157 = vld [vmem:[%s2 + $0x39c] sm:$0xff]
  %v158 = vld [vmem:[%s2 + $0x3a4] sm:$0xff]
  %v159 = vld [vmem:[%s2 + $0x3ac] sm:$0xff]
  %v160 = vld [vmem:[%s2 + $0x3b4] sm:$0xf]
  %v161 = vld [vmem:[%s2 + $0x3b8] sm:$0xff]
  %v162 = vld [vmem:[%s2 + $0x3c0] sm:$0xff]
  %v163 = vld [vmem:[%s2 + $0x3c8] sm:$0xff]
  %v164 = vld [vmem:[%s2 + $0x3d0] sm:$0xf]
  %v165 = vld [vmem:[%s2 + $0x3d4] sm:$0xff]
  %v166 = vld [vmem:[%s2 + $0x3dc] sm:$0xff]
  %v167 = vld [vmem:[%s2 + $0x3e4] sm:$0xff]
  %v168 = vld [vmem:[%s2 + $0x3ec] sm:$0xf]
  %v169 = vld [vmem:[%s2 + $0x3f0] sm:$0xff]
  %v170 = vld [vmem:[%s2 + $0x3f8] sm:$0xff]
  %v171 = vld [vmem:[%s2 + $0x400] sm:$0xff]
  %v172 = vld [vmem:[%s2 + $0x408] sm:$0xf]
  %v173 = vld [vmem:[%s2 + $0x40c] sm:$0xff]
  %v174 = vld [vmem:[%s2 + $0x414] sm:$0xff]
  %v175 = vld [vmem:[%s2 + $0x41c] sm:$0xff]
  %v176 = vld [vmem:[%s2 + $0x424] sm:$0xf]
  %v177 = vld [vmem:[%s2 + $0x428] sm:$0xff]
  %v178 = vld [vmem:[%s2 + $0x430] sm:$0xff]
  %v179 = vld [vmem:[%s2 + $0x438] sm:$0xff]
  %v180 = vld [vmem:[%s2 + $0x440] sm:$0xf]
  %v181 = vld [vmem:[%s2 + $0x444] sm:$0xff]
  %v182 = vld [vmem:[%s2 + $0x44c] sm:$0xff]
  %v183 = vld [vmem:[%s2 + $0x454] sm:$0xff]
  %v184 = vld [vmem:[%s2 + $0x45c] sm:$0xf]
  %v185 = vld [vmem:[%s2 + $0x460] sm:$0xff]
  %v186 = vld [vmem:[%s2 + $0x468] sm:$0xff]
  %v187 = vld [vmem:[%s2 + $0x470] sm:$0xff]
  %v188 = vld [vmem:[%s2 + $0x478] sm:$0xf]
  %v189 = vld [vmem:[%s2 + $0x47c] sm:$0xff]
  %v190 = vld [vmem:[%s2 + $0x484] sm:$0xff]
  %v191 = vld [vmem:[%s2 + $0x48c] sm:$0xff]
  %v192 = vld [vmem:[%s2 + $0x494] sm:$0xf]
  %v193 = vld [vmem:[%s2 + $0x498] sm:$0xff]
  %v194 = vld [vmem:[%s2 + $0x4a0] sm:$0xff]
  %v195 = vld [vmem:[%s2 + $0x4a8] sm:$0xff]
  %v196 = vld [vmem:[%s2 + $0x4b0] sm:$0xf]
  %v197 = vld [vmem:[%s2 + $0x4b4] sm:$0xff]
  %v198 = vld [vmem:[%s2 + $0x4bc] sm:$0xff]
  %v199 = vld [vmem:[%s2 + $0x4c4] sm:$0xff]
  %v200 = vld [vmem:[%s2 + $0x4cc] sm:$0xf]
  %v201 = vld [vmem:[%s2 + $0x4d0] sm:$0xff]
  %v202 = vld [vmem:[%s2 + $0x4d8] sm:$0xff]
  %v203 = vld [vmem:[%s2 + $0x4e0] sm:$0xff]
  %v204 = vld [vmem:[%s2 + $0x4e8] sm:$0xf]
  %v205 = vld [vmem:[%s2 + $0x4ec] sm:$0xff]
  %v206 = vld [vmem:[%s2 + $0x4f4] sm:$0xff]
  %v207 = vld [vmem:[%s2 + $0x4fc] sm:$0xff]
  %v208 = vld [vmem:[%s2 + $0x504] sm:$0xf]
  %v209 = vld [vmem:[%s2 + $0x508] sm:$0xff]
  %v210 = vld [vmem:[%s2 + $0x510] sm:$0xff]
  %v211 = vld [vmem:[%s2 + $0x518] sm:$0xff]
  %v212 = vld [vmem:[%s2 + $0x520] sm:$0xf]
  %v213 = vld [vmem:[%s2 + $0x524] sm:$0xff]
  %v214 = vld [vmem:[%s2 + $0x52c] sm:$0xff]
  %v215 = vld [vmem:[%s2 + $0x534] sm:$0xff]
  %v216 = vld [vmem:[%s2 + $0x53c] sm:$0xf]
  %v217 = vld [vmem:[%s2 + $0x540] sm:$0xff]
  %v218 = vld [vmem:[%s2 + $0x548] sm:$0xff]
  %v219 = vld [vmem:[%s2 + $0x550] sm:$0xff]
  %v220 = vld [vmem:[%s2 + $0x558] sm:$0xf]
  %v221 = vld [vmem:[%s2 + $0x55c] sm:$0xff]
  %v222 = vld [vmem:[%s2 + $0x564] sm:$0xff]
  %v223 = vld [vmem:[%s2 + $0x56c] sm:$0xff]
  %v224 = vld [vmem:[%s2 + $0x574] sm:$0xf]
  %v225 = vld [vmem:[%s2 + $0x578] sm:$0xff]
  %v226 = vld [vmem:[%s2 + $0x580] sm:$0xff]
  %v227 = vld [vmem:[%s2 + $0x588] sm:$0xff]
  %v228 = vld [vmem:[%s2 + $0x590] sm:$0xf]
  %v229 = vld [vmem:[%s2 + $0x594] sm:$0xff]
  %v230 = vld [vmem:[%s2 + $0x59c] sm:$0xff]
  %v231 = vld [vmem:[%s2 + $0x5a4] sm:$0xff]
  %v232 = vld [vmem:[%s2 + $0x5ac] sm:$0xf]
  %v233 = vld [vmem:[%s2 + $0x5b0] sm:$0xff]
  %v234 = vld [vmem:[%s2 + $0x5b8] sm:$0xff]
  %v235 = vld [vmem:[%s2 + $0x5c0] sm:$0xff]
  %v236 = vld [vmem:[%s2 + $0x5c8] sm:$0xf]
  %v237 = vld [vmem:[%s2 + $0x5cc] sm:$0xff]
  %v238 = vld [vmem:[%s2 + $0x5d4] sm:$0xff]
  %v239 = vld [vmem:[%s2 + $0x5dc] sm:$0xff]
  %v240 = vld [vmem:[%s2 + $0x5e4] sm:$0xf]
  %v241 = vld [vmem:[%s2 + $0x5e8] sm:$0xff]
  %v242 = vld [vmem:[%s2 + $0x5f0] sm:$0xff]
  %v243 = vld [vmem:[%s2 + $0x5f8] sm:$0xff]
  %v244 = vld [vmem:[%s2 + $0x600] sm:$0xf]
  %v245 = vld [vmem:[%s2 + $0x604] sm:$0xff]
  %v246 = vld [vmem:[%s2 + $0x60c] sm:$0xff]
  %v247 = vld [vmem:[%s2 + $0x614] sm:$0xff]
  %v248 = vld [vmem:[%s2 + $0x61c] sm:$0xf]
  %v249 = vld [vmem:[%s2 + $0x620] sm:$0xff]
  %v250 = vld [vmem:[%s2 + $0x628] sm:$0xff]
  %v251 = vld [vmem:[%s2 + $0x630] sm:$0xff]
  %v252 = vld [vmem:[%s2 + $0x638] sm:$0xf]
  %v253 = vld [vmem:[%s2 + $0x63c] sm:$0xff]
  %v254 = vld [vmem:[%s2 + $0x644] sm:$0xff]
  %v255 = vld [vmem:[%s2 + $0x64c] sm:$0xff]
  %v256 = vld [vmem:[%s2 + $0x654] sm:$0xf]
  %v257 = vld [vmem:[%s2 + $0x658] sm:$0xff]
  %v258 = vld [vmem:[%s2 + $0x660] sm:$0xff]
  %v259 = vld [vmem:[%s2 + $0x668] sm:$0xff]
  %v260 = vld [vmem:[%s2 + $0x670] sm:$0xf]
  %v261 = vld [vmem:[%s2 + $0x674] sm:$0xff]
  %v262 = vld [vmem:[%s2 + $0x67c] sm:$0xff]
  %v263 = vld [vmem:[%s2 + $0x684] sm:$0xff]
  %v264 = vld [vmem:[%s2 + $0x68c] sm:$0xf]
  %v265 = vld [vmem:[%s2 + $0x690] sm:$0xff]
  %v266 = vld [vmem:[%s2 + $0x698] sm:$0xff]
  %v267 = vld [vmem:[%s2 + $0x6a0] sm:$0xff]
  %v268 = vld [vmem:[%s2 + $0x6a8] sm:$0xf]
  %v269 = vld [vmem:[%s2 + $0x6ac] sm:$0xff]
  %v270 = vld [vmem:[%s2 + $0x6b4] sm:$0xff]
  %v271 = vld [vmem:[%s2 + $0x6bc] sm:$0xff]
  %v272 = vld [vmem:[%s2 + $0x6c4] sm:$0xf]
  %v273 = vld [vmem:[%s2 + $0x6c8] sm:$0xff]
  %v274 = vld [vmem:[%s2 + $0x6d0] sm:$0xff]
  %v275 = vld [vmem:[%s2 + $0x6d8] sm:$0xff]
  %v276 = vld [vmem:[%s2 + $0x6e0] sm:$0xf]
  %v277 = vld [vmem:[%s2 + $0x6e4] sm:$0xff]
  %v278 = vld [vmem:[%s2 + $0x6ec] sm:$0xff]
  %v279 = vld [vmem:[%s2 + $0x6f4] sm:$0xff]
  %v280 = vld [vmem:[%s2 + $0x6fc] sm:$0xf]
  %v281 = vld [vmem:[%s2 + $0x700] sm:$0xff]
  %v282 = vld [vmem:[%s2 + $0x708] sm:$0xff]
  %v283 = vld [vmem:[%s2 + $0x710] sm:$0xff]
  %v284 = vld [vmem:[%s2 + $0x718] sm:$0xf]
  %v285 = vld [vmem:[%s2 + $0x71c] sm:$0xff]
  %v286 = vld [vmem:[%s2 + $0x724] sm:$0xff]
  %v287 = vld [vmem:[%s2 + $0x72c] sm:$0xff]
  %v288 = vld [vmem:[%s2 + $0x734] sm:$0xf]
  %v289 = vld [vmem:[%s2 + $0x738] sm:$0xff]
  %v290 = vld [vmem:[%s2 + $0x740] sm:$0xff]
  %v291 = vld [vmem:[%s2 + $0x748] sm:$0xff]
  %v292 = vld [vmem:[%s2 + $0x750] sm:$0xf]
  %v293 = vld [vmem:[%s2 + $0x754] sm:$0xff]
  %v294 = vld [vmem:[%s2 + $0x75c] sm:$0xff]
  %v295 = vld [vmem:[%s2 + $0x764] sm:$0xff]
  %v296 = vld [vmem:[%s2 + $0x76c] sm:$0xf]
  %v297 = vld [vmem:[%s2 + $0x770] sm:$0xff]
  %v298 = vld [vmem:[%s2 + $0x778] sm:$0xff]
  %v299 = vld [vmem:[%s2 + $0x780] sm:$0xff]
  %v300 = vld [vmem:[%s2 + $0x788] sm:$0xf]
  %v301 = vld [vmem:[%s2 + $0x78c] sm:$0xff]
  %v302 = vld [vmem:[%s2 + $0x794] sm:$0xff]
  %v303 = vld [vmem:[%s2 + $0x79c] sm:$0xff]
  %v304 = vld [vmem:[%s2 + $0x7a4] sm:$0xf]
  %v305 = vld [vmem:[%s2 + $0x7a8] sm:$0xff]
  %v306 = vld [vmem:[%s2 + $0x7b0] sm:$0xff]
  %v307 = vld [vmem:[%s2 + $0x7b8] sm:$0xff]
  %v308 = vld [vmem:[%s2 + $0x7c0] sm:$0xf]
  %v309 = vld [vmem:[%s2 + $0x7c4] sm:$0xff]
  %v310 = vld [vmem:[%s2 + $0x7cc] sm:$0xff]
  %v311 = vld [vmem:[%s2 + $0x7d4] sm:$0xff]
  %v312 = vld [vmem:[%s2 + $0x7dc] sm:$0xf]
  %v313 = vld [vmem:[%s2 + $0x7e0] sm:$0xff]
  %v314 = vld [vmem:[%s2 + $0x7e8] sm:$0xff]
  %v315 = vld [vmem:[%s2 + $0x7f0] sm:$0xff]
  %v316 = vld [vmem:[%s2 + $0x7f8] sm:$0xf]
  %v317 = vld [vmem:[%s2 + $0x7fc] sm:$0xff]
  %v318 = vld [vmem:[%s2 + $0x804] sm:$0xff]
  %v319 = vld [vmem:[%s2 + $0x80c] sm:$0xff]
  %v320 = vld [vmem:[%s2 + $0x814] sm:$0xf]
  %v321 = vld [vmem:[%s2 + $0x818] sm:$0xff]
  %v322 = vld [vmem:[%s2 + $0x820] sm:$0xff]
  %v323 = vld [vmem:[%s2 + $0x828] sm:$0xff]
  %v324 = vld [vmem:[%s2 + $0x830] sm:$0xf]
  %v325 = vld [vmem:[%s2 + $0x834] sm:$0xff]
  %v326 = vld [vmem:[%s2 + $0x83c] sm:$0xff]
  %v327 = vld [vmem:[%s2 + $0x844] sm:$0xff]
  %v328 = vld [vmem:[%s2 + $0x84c] sm:$0xf]
  %v329 = vld [vmem:[%s2 + $0x850] sm:$0xff]
  %v330 = vld [vmem:[%s2 + $0x858] sm:$0xff]
  %v331 = vld [vmem:[%s2 + $0x860] sm:$0xff]
  %v332 = vld [vmem:[%s2 + $0x868] sm:$0xf]
  %v333 = vld [vmem:[%s2 + $0x86c] sm:$0xff]
  %v334 = vld [vmem:[%s2 + $0x874] sm:$0xff]
  %v335 = vld [vmem:[%s2 + $0x87c] sm:$0xff]
  %v336 = vld [vmem:[%s2 + $0x884] sm:$0xf]
  %v337 = vld [vmem:[%s2 + $0x888] sm:$0xff]
  %v338 = vld [vmem:[%s2 + $0x890] sm:$0xff]
  %v339 = vld [vmem:[%s2 + $0x898] sm:$0xff]
  %v340 = vld [vmem:[%s2 + $0x8a0] sm:$0xf]
  %v341 = vld [vmem:[%s2 + $0x8a4] sm:$0xff]
  %v342 = vld [vmem:[%s2 + $0x8ac] sm:$0xff]
  %v343 = vld [vmem:[%s2 + $0x8b4] sm:$0xff]
  %v344 = vld [vmem:[%s2 + $0x8bc] sm:$0xf]
  %v345 = vld [vmem:[%s2 + $0x8c0] sm:$0xff]
  %v346 = vld [vmem:[%s2 + $0x8c8] sm:$0xff]
  %v347 = vld [vmem:[%s2 + $0x8d0] sm:$0xff]
  %v348 = vld [vmem:[%s2 + $0x8d8] sm:$0xf]
  %v349 = vld [vmem:[%s2 + $0x8dc] sm:$0xff]
  %v350 = vld [vmem:[%s2 + $0x8e4] sm:$0xff]
  %v351 = vld [vmem:[%s2 + $0x8ec] sm:$0xff]
  %v352 = vld [vmem:[%s2 + $0x8f4] sm:$0xf]
  %v353 = vld [vmem:[%s2 + $0x8f8] sm:$0xff]
  %v354 = vld [vmem:[%s2 + $0x900] sm:$0xff]
  %v355 = vld [vmem:[%s2 + $0x908] sm:$0xff]
  %v356 = vld [vmem:[%s2 + $0x910] sm:$0xf]
  %v357 = vld [vmem:[%s2 + $0x914] sm:$0xff]
  %v358 = vld [vmem:[%s2 + $0x91c] sm:$0xff]
  %v359 = vld [vmem:[%s2 + $0x924] sm:$0xff]
  %v360 = vld [vmem:[%s2 + $0x92c] sm:$0xf]
  %v361 = vld [vmem:[%s2 + $0x930] sm:$0xff]
  %v362 = vld [vmem:[%s2 + $0x938] sm:$0xff]
  %v363 = vld [vmem:[%s2 + $0x940] sm:$0xff]
  %v364 = vld [vmem:[%s2 + $0x948] sm:$0xf]
  %v365 = vld [vmem:[%s2 + $0x94c] sm:$0xff]
  %v366 = vld [vmem:[%s2 + $0x954] sm:$0xff]
  %v367 = vld [vmem:[%s2 + $0x95c] sm:$0xff]
  %v368 = vld [vmem:[%s2 + $0x964] sm:$0xf]
  %v369 = vld [vmem:[%s2 + $0x968] sm:$0xff]
  %v370 = vld [vmem:[%s2 + $0x970] sm:$0xff]
  %v371 = vld [vmem:[%s2 + $0x978] sm:$0xff]
  %v372 = vld [vmem:[%s2 + $0x980] sm:$0xf]
  %v373 = vld [vmem:[%s2 + $0x984] sm:$0xff]
  %v374 = vld [vmem:[%s2 + $0x98c] sm:$0xff]
  %v375 = vld [vmem:[%s2 + $0x994] sm:$0xff]
  %v376 = vld [vmem:[%s2 + $0x99c] sm:$0xf]
  %v377 = vld [vmem:[%s2 + $0x9a0] sm:$0xff]
  %v378 = vld [vmem:[%s2 + $0x9a8] sm:$0xff]
  %v379 = vld [vmem:[%s2 + $0x9b0] sm:$0xff]
  %v380 = vld [vmem:[%s2 + $0x9b8] sm:$0xf]
  %v381 = vld [vmem:[%s2 + $0x9bc] sm:$0xff]
  %v382 = vld [vmem:[%s2 + $0x9c4] sm:$0xff]
  %v383 = vld [vmem:[%s2 + $0x9cc] sm:$0xff]
  %v384 = vld [vmem:[%s2 + $0x9d4] sm:$0xf]
  %v385 = vld [vmem:[%s2 + $0x9d8] sm:$0xff]
  %v386 = vld [vmem:[%s2 + $0x9e0] sm:$0xff]
  %v387 = vld [vmem:[%s2 + $0x9e8] sm:$0xff]
  %v388 = vld [vmem:[%s2 + $0x9f0] sm:$0xf]
  %v389 = vld [vmem:[%s2 + $0x9f4] sm:$0xff]
  %v390 = vld [vmem:[%s2 + $0x9fc] sm:$0xff]
  %v391 = vld [vmem:[%s2 + $0xa04] sm:$0xff]
  %v392 = vld [vmem:[%s2 + $0xa0c] sm:$0xf]
  %v393 = vld [vmem:[%s2 + $0xa10] sm:$0xff]
  %v394 = vld [vmem:[%s2 + $0xa18] sm:$0xff]
  %v395 = vld [vmem:[%s2 + $0xa20] sm:$0xff]
  %v396 = vld [vmem:[%s2 + $0xa28] sm:$0xf]
  %v397 = vld [vmem:[%s2 + $0xa2c] sm:$0xff]
  %v398 = vld [vmem:[%s2 + $0xa34] sm:$0xff]
  %v399 = vld [vmem:[%s2 + $0xa3c] sm:$0xff]
  %v400 = vld [vmem:[%s2 + $0xa44] sm:$0xf]
  %v401 = vld [vmem:[%s2 + $0xa48] sm:$0xff]
  %v402 = vld [vmem:[%s2 + $0xa50] sm:$0xff]
  %v403 = vld [vmem:[%s2 + $0xa58] sm:$0xff]
  %v404 = vld [vmem:[%s2 + $0xa60] sm:$0xf]
  %v405 = vld [vmem:[%s2 + $0xa64] sm:$0xff]
  %v406 = vld [vmem:[%s2 + $0xa6c] sm:$0xff]
  %v407 = vld [vmem:[%s2 + $0xa74] sm:$0xff]
  %v408 = vld [vmem:[%s2 + $0xa7c] sm:$0xf]
  %v409 = vld [vmem:[%s2 + $0xa80] sm:$0xff]
  %v410 = vld [vmem:[%s2 + $0xa88] sm:$0xff]
  %v411 = vld [vmem:[%s2 + $0xa90] sm:$0xff]
  %v412 = vld [vmem:[%s2 + $0xa98] sm:$0xf]
  %v413 = vld [vmem:[%s2 + $0xa9c] sm:$0xff]
  %v414 = vld [vmem:[%s2 + $0xaa4] sm:$0xff]
  %v415 = vld [vmem:[%s2 + $0xaac] sm:$0xff]
  %v416 = vld [vmem:[%s2 + $0xab4] sm:$0xf]
  %v417 = vld [vmem:[%s2 + $0xab8] sm:$0xff]
  %v418 = vld [vmem:[%s2 + $0xac0] sm:$0xff]
  %v419 = vld [vmem:[%s2 + $0xac8] sm:$0xff]
  %v420 = vld [vmem:[%s2 + $0xad0] sm:$0xf]
  %v421 = vld [vmem:[%s2 + $0xad4] sm:$0xff]
  %v422 = vld [vmem:[%s2 + $0xadc] sm:$0xff]
  %v423 = vld [vmem:[%s2 + $0xae4] sm:$0xff]
  %v424 = vld [vmem:[%s2 + $0xaec] sm:$0xf]
  %v425 = vld [vmem:[%s2 + $0xaf0] sm:$0xff]
  %v426 = vld [vmem:[%s2 + $0xaf8] sm:$0xff]
  %v427 = vld [vmem:[%s2 + $0xb00] sm:$0xff]
  %v428 = vld [vmem:[%s2 + $0xb08] sm:$0xf]
  %v429 = vld [vmem:[%s2 + $0xb0c] sm:$0xff]
  %v430 = vld [vmem:[%s2 + $0xb14] sm:$0xff]
  %v431 = vld [vmem:[%s2 + $0xb1c] sm:$0xff]
  %v432 = vld [vmem:[%s2 + $0xb24] sm:$0xf]
  %v433 = vld [vmem:[%s2 + $0xb28] sm:$0xff]
  %v434 = vld [vmem:[%s2 + $0xb30] sm:$0xff]
  %v435 = vld [vmem:[%s2 + $0xb38] sm:$0xff]
  %v436 = vld [vmem:[%s2 + $0xb40] sm:$0xf]
  %v437 = vld [vmem:[%s2 + $0xb44] sm:$0xff]
  %v438 = vld [vmem:[%s2 + $0xb4c] sm:$0xff]
  %v439 = vld [vmem:[%s2 + $0xb54] sm:$0xff]
  %v440 = vld [vmem:[%s2 + $0xb5c] sm:$0xf]
  %v441 = vld [vmem:[%s2 + $0xb60] sm:$0xff]
  %v442 = vld [vmem:[%s2 + $0xb68] sm:$0xff]
  %v443 = vld [vmem:[%s2 + $0xb70] sm:$0xff]
  %v444 = vld [vmem:[%s2 + $0xb78] sm:$0xf]
  %v445 = vld [vmem:[%s2 + $0xb7c] sm:$0xff]
  %v446 = vld [vmem:[%s2 + $0xb84] sm:$0xff]
  %v447 = vld [vmem:[%s2 + $0xb8c] sm:$0xff]
  %v448 = vld [vmem:[%s2 + $0xb94] sm:$0xf]
  %v449 = vld [vmem:[%s2 + $0xb98] sm:$0xff]
  %v450 = vld [vmem:[%s2 + $0xba0] sm:$0xff]
  %v451 = vld [vmem:[%s2 + $0xba8] sm:$0xff]
  %v452 = vld [vmem:[%s2 + $0xbb0] sm:$0xf]
  %v453 = vld [vmem:[%s2 + $0xbb4] sm:$0xff]
  %v454 = vld [vmem:[%s2 + $0xbbc] sm:$0xff]
  %v455 = vld [vmem:[%s2 + $0xbc4] sm:$0xff]
  %v456 = vld [vmem:[%s2 + $0xbcc] sm:$0xf]
  %v457 = vld [vmem:[%s2 + $0xbd0] sm:$0xff]
  %v458 = vld [vmem:[%s2 + $0xbd8] sm:$0xff]
  %v459 = vld [vmem:[%s2 + $0xbe0] sm:$0xff]
  %v460 = vld [vmem:[%s2 + $0xbe8] sm:$0xf]
  %v461 = vld [vmem:[%s2 + $0xbec] sm:$0xff]
  %v462 = vld [vmem:[%s2 + $0xbf4] sm:$0xff]
  %v463 = vld [vmem:[%s2 + $0xbfc] sm:$0xff]
  %v464 = vld [vmem:[%s2 + $0xc04] sm:$0xf]
  %v465 = vld [vmem:[%s2 + $0xc08] sm:$0xff]
  %v466 = vld [vmem:[%s2 + $0xc10] sm:$0xff]
  %v467 = vld [vmem:[%s2 + $0xc18] sm:$0xff]
  %v468 = vld [vmem:[%s2 + $0xc20] sm:$0xf]
  %v469 = vld [vmem:[%s2 + $0xc24] sm:$0xff]
  %v470 = vld [vmem:[%s2 + $0xc2c] sm:$0xff]
  %v471 = vld [vmem:[%s2 + $0xc34] sm:$0xff]
  %v472 = vld [vmem:[%s2 + $0xc3c] sm:$0xf]
  %s473 = sld [smem:[#allocation2]]
  %v474 = vstv %s473
  %v479 = vunpack.c.l.b16 %v21
  %v480 = vunpack.c.h.b16 %v21
  %v481 = vunpack.c.l.b16 %v22
  %v482 = vunpack.c.h.b16 %v22
  %v483 = vunpack.c.l.b16 %v23
  %v484 = vunpack.c.h.b16 %v23
  %v485 = vunpack.c.l.b16 %v24
  %v486 = vpack.c.b16 %v479, %v479
  %v487 = vpack.c.b16 %v480, %v480
  %v488 = vpack.c.b16 %v481, %v481
  %v489 = vpack.c.b16 %v482, %v482
  %v490 = vpack.c.b16 %v483, %v483
  %v491 = vpack.c.b16 %v484, %v484
  %v492 = vpack.c.b16 %v485, %v485
  %v948 = vunpack.c.l.b16 %v25
  %v949 = vunpack.c.h.b16 %v25
  %v950 = vunpack.c.l.b16 %v26
  %v951 = vunpack.c.h.b16 %v26
  %v952 = vunpack.c.l.b16 %v27
  %v953 = vunpack.c.h.b16 %v27
  %v954 = vunpack.c.l.b16 %v28
  %v955 = vunpack.c.l.b16 %v29
  %v956 = vunpack.c.h.b16 %v29
  %v957 = vunpack.c.l.b16 %v30
  %v958 = vunpack.c.h.b16 %v30
  %v959 = vunpack.c.l.b16 %v31
  %v960 = vunpack.c.h.b16 %v31
  %v961 = vunpack.c.l.b16 %v32
  %v962 = vunpack.c.l.b16 %v33
  %v963 = vunpack.c.h.b16 %v33
  %v964 = vunpack.c.l.b16 %v34
  %v965 = vunpack.c.h.b16 %v34
  %v966 = vunpack.c.l.b16 %v35
  %v967 = vunpack.c.h.b16 %v35
  %v968 = vunpack.c.l.b16 %v36
  %v969 = vunpack.c.l.b16 %v37
  %v970 = vunpack.c.h.b16 %v37
  %v971 = vunpack.c.l.b16 %v38
  %v972 = vunpack.c.h.b16 %v38
  %v973 = vunpack.c.l.b16 %v39
  %v974 = vunpack.c.h.b16 %v39
  %v975 = vunpack.c.l.b16 %v40
  %v976 = vunpack.c.l.b16 %v41
  %v977 = vunpack.c.h.b16 %v41
  %v978 = vunpack.c.l.b16 %v42
  %v979 = vunpack.c.h.b16 %v42
  %v980 = vunpack.c.l.b16 %v43
  %v981 = vunpack.c.h.b16 %v43
  %v982 = vunpack.c.l.b16 %v44
  %v983 = vunpack.c.l.b16 %v45
  %v984 = vunpack.c.h.b16 %v45
  %v985 = vunpack.c.l.b16 %v46
  %v986 = vunpack.c.h.b16 %v46
  %v987 = vunpack.c.l.b16 %v47
  %v988 = vunpack.c.h.b16 %v47
  %v989 = vunpack.c.l.b16 %v48
  %v990 = vunpack.c.l.b16 %v49
  %v991 = vunpack.c.h.b16 %v49
  %v992 = vunpack.c.l.b16 %v50
  %v993 = vunpack.c.h.b16 %v50
  %v994 = vunpack.c.l.b16 %v51
  %v995 = vunpack.c.h.b16 %v51
  %v996 = vunpack.c.l.b16 %v52
  %v997 = vunpack.c.l.b16 %v53
  %v998 = vunpack.c.h.b16 %v53
  %v999 = vunpack.c.l.b16 %v54
  %v1000 = vunpack.c.h.b16 %v54
  %v1001 = vunpack.c.l.b16 %v55
  %v1002 = vunpack.c.h.b16 %v55
  %v1003 = vunpack.c.l.b16 %v56
  %v1004 = vunpack.c.l.b16 %v57
  %v1005 = vunpack.c.h.b16 %v57
  %v1006 = vunpack.c.l.b16 %v58
  %v1007 = vunpack.c.h.b16 %v58
  %v1008 = vunpack.c.l.b16 %v59
  %v1009 = vunpack.c.h.b16 %v59
  %v1010 = vunpack.c.l.b16 %v60
  %v1011 = vunpack.c.l.b16 %v61
  %v1012 = vunpack.c.h.b16 %v61
  %v1013 = vunpack.c.l.b16 %v62
  %v1014 = vunpack.c.h.b16 %v62
  %v1015 = vunpack.c.l.b16 %v63
  %v1016 = vunpack.c.h.b16 %v63
  %v1017 = vunpack.c.l.b16 %v64
  %v1018 = vunpack.c.l.b16 %v65
  %v1019 = vunpack.c.h.b16 %v65
  %v1020 = vunpack.c.l.b16 %v66
  %v1021 = vunpack.c.h.b16 %v66
  %v1022 = vunpack.c.l.b16 %v67
  %v1023 = vunpack.c.h.b16 %v67
  %v1024 = vunpack.c.l.b16 %v68
  %v1025 = vunpack.c.l.b16 %v69
  %v1026 = vunpack.c.h.b16 %v69
  %v1027 = vunpack.c.l.b16 %v70
  %v1028 = vunpack.c.h.b16 %v70
  %v1029 = vunpack.c.l.b16 %v71
  %v1030 = vunpack.c.h.b16 %v71
  %v1031 = vunpack.c.l.b16 %v72
  %v1032 = vunpack.c.l.b16 %v73
  %v1033 = vunpack.c.h.b16 %v73
  %v1034 = vunpack.c.l.b16 %v74
  %v1035 = vunpack.c.h.b16 %v74
  %v1036 = vunpack.c.l.b16 %v75
  %v1037 = vunpack.c.h.b16 %v75
  %v1038 = vunpack.c.l.b16 %v76
  %v1039 = vunpack.c.l.b16 %v77
  %v1040 = vunpack.c.h.b16 %v77
  %v1041 = vunpack.c.l.b16 %v78
  %v1042 = vunpack.c.h.b16 %v78
  %v1043 = vunpack.c.l.b16 %v79
  %v1044 = vunpack.c.h.b16 %v79
  %v1045 = vunpack.c.l.b16 %v80
  %v1046 = vunpack.c.l.b16 %v81
  %v1047 = vunpack.c.h.b16 %v81
  %v1048 = vunpack.c.l.b16 %v82
  %v1049 = vunpack.c.h.b16 %v82
  %v1050 = vunpack.c.l.b16 %v83
  %v1051 = vunpack.c.h.b16 %v83
  %v1052 = vunpack.c.l.b16 %v84
  %v1053 = vunpack.c.l.b16 %v85
  %v1054 = vunpack.c.h.b16 %v85
  %v1055 = vunpack.c.l.b16 %v86
  %v1056 = vunpack.c.h.b16 %v86
  %v1057 = vunpack.c.l.b16 %v87
  %v1058 = vunpack.c.h.b16 %v87
  %v1059 = vunpack.c.l.b16 %v88
  %v1060 = vunpack.c.l.b16 %v89
  %v1061 = vunpack.c.h.b16 %v89
  %v1062 = vunpack.c.l.b16 %v90
  %v1063 = vunpack.c.h.b16 %v90
  %v1064 = vunpack.c.l.b16 %v91
  %v1065 = vunpack.c.h.b16 %v91
  %v1066 = vunpack.c.l.b16 %v92
  %v1067 = vunpack.c.l.b16 %v93
  %v1068 = vunpack.c.h.b16 %v93
  %v1069 = vunpack.c.l.b16 %v94
  %v1070 = vunpack.c.h.b16 %v94
  %v1071 = vunpack.c.l.b16 %v95
  %v1072 = vunpack.c.h.b16 %v95
  %v1073 = vunpack.c.l.b16 %v96
  %v1074 = vunpack.c.l.b16 %v97
  %v1075 = vunpack.c.h.b16 %v97
  %v1076 = vunpack.c.l.b16 %v98
  %v1077 = vunpack.c.h.b16 %v98
  %v1078 = vunpack.c.l.b16 %v99
  %v1079 = vunpack.c.h.b16 %v99
  %v1080 = vunpack.c.l.b16 %v100
  %v1081 = vunpack.c.l.b16 %v101
  %v1082 = vunpack.c.h.b16 %v101
  %v1083 = vunpack.c.l.b16 %v102
  %v1084 = vunpack.c.h.b16 %v102
  %v1085 = vunpack.c.l.b16 %v103
  %v1086 = vunpack.c.h.b16 %v103
  %v1087 = vunpack.c.l.b16 %v104
  %v1088 = vunpack.c.l.b16 %v105
  %v1089 = vunpack.c.h.b16 %v105
  %v1090 = vunpack.c.l.b16 %v106
  %v1091 = vunpack.c.h.b16 %v106
  %v1092 = vunpack.c.l.b16 %v107
  %v1093 = vunpack.c.h.b16 %v107
  %v1094 = vunpack.c.l.b16 %v108
  %v1095 = vunpack.c.l.b16 %v109
  %v1096 = vunpack.c.h.b16 %v109
  %v1097 = vunpack.c.l.b16 %v110
  %v1098 = vunpack.c.h.b16 %v110
  %v1099 = vunpack.c.l.b16 %v111
  %v1100 = vunpack.c.h.b16 %v111
  %v1101 = vunpack.c.l.b16 %v112
  %v1102 = vunpack.c.l.b16 %v113
  %v1103 = vunpack.c.h.b16 %v113
  %v1104 = vunpack.c.l.b16 %v114
  %v1105 = vunpack.c.h.b16 %v114
  %v1106 = vunpack.c.l.b16 %v115
  %v1107 = vunpack.c.h.b16 %v115
  %v1108 = vunpack.c.l.b16 %v116
  %v1109 = vunpack.c.l.b16 %v117
  %v1110 = vunpack.c.h.b16 %v117
  %v1111 = vunpack.c.l.b16 %v118
  %v1112 = vunpack.c.h.b16 %v118
  %v1113 = vunpack.c.l.b16 %v119
  %v1114 = vunpack.c.h.b16 %v119
  %v1115 = vunpack.c.l.b16 %v120
  %v1116 = vunpack.c.l.b16 %v121
  %v1117 = vunpack.c.h.b16 %v121
  %v1118 = vunpack.c.l.b16 %v122
  %v1119 = vunpack.c.h.b16 %v122
  %v1120 = vunpack.c.l.b16 %v123
  %v1121 = vunpack.c.h.b16 %v123
  %v1122 = vunpack.c.l.b16 %v124
  %v1123 = vunpack.c.l.b16 %v125
  %v1124 = vunpack.c.h.b16 %v125
  %v1125 = vunpack.c.l.b16 %v126
  %v1126 = vunpack.c.h.b16 %v126
  %v1127 = vunpack.c.l.b16 %v127
  %v1128 = vunpack.c.h.b16 %v127
  %v1129 = vunpack.c.l.b16 %v128
  %v1130 = vunpack.c.l.b16 %v129
  %v1131 = vunpack.c.h.b16 %v129
  %v1132 = vunpack.c.l.b16 %v130
  %v1133 = vunpack.c.h.b16 %v130
  %v1134 = vunpack.c.l.b16 %v131
  %v1135 = vunpack.c.h.b16 %v131
  %v1136 = vunpack.c.l.b16 %v132
  %v1137 = vunpack.c.l.b16 %v133
  %v1138 = vunpack.c.h.b16 %v133
  %v1139 = vunpack.c.l.b16 %v134
  %v1140 = vunpack.c.h.b16 %v134
  %v1141 = vunpack.c.l.b16 %v135
  %v1142 = vunpack.c.h.b16 %v135
  %v1143 = vunpack.c.l.b16 %v136
  %v1144 = vunpack.c.l.b16 %v137
  %v1145 = vunpack.c.h.b16 %v137
  %v1146 = vunpack.c.l.b16 %v138
  %v1147 = vunpack.c.h.b16 %v138
  %v1148 = vunpack.c.l.b16 %v139
  %v1149 = vunpack.c.h.b16 %v139
  %v1150 = vunpack.c.l.b16 %v140
  %v1151 = vunpack.c.l.b16 %v141
  %v1152 = vunpack.c.h.b16 %v141
  %v1153 = vunpack.c.l.b16 %v142
  %v1154 = vunpack.c.h.b16 %v142
  %v1155 = vunpack.c.l.b16 %v143
  %v1156 = vunpack.c.h.b16 %v143
  %v1157 = vunpack.c.l.b16 %v144
  %v1158 = vunpack.c.l.b16 %v145
  %v1159 = vunpack.c.h.b16 %v145
  %v1160 = vunpack.c.l.b16 %v146
  %v1161 = vunpack.c.h.b16 %v146
  %v1162 = vunpack.c.l.b16 %v147
  %v1163 = vunpack.c.h.b16 %v147
  %v1164 = vunpack.c.l.b16 %v148
  %v1165 = vunpack.c.l.b16 %v149
  %v1166 = vunpack.c.h.b16 %v149
  %v1167 = vunpack.c.l.b16 %v150
  %v1168 = vunpack.c.h.b16 %v150
  %v1169 = vunpack.c.l.b16 %v151
  %v1170 = vunpack.c.h.b16 %v151
  %v1171 = vunpack.c.l.b16 %v152
  %v1172 = vunpack.c.l.b16 %v153
  %v1173 = vunpack.c.h.b16 %v153
  %v1174 = vunpack.c.l.b16 %v154
  %v1175 = vunpack.c.h.b16 %v154
  %v1176 = vunpack.c.l.b16 %v155
  %v1177 = vunpack.c.h.b16 %v155
  %v1178 = vunpack.c.l.b16 %v156
  %v1179 = vunpack.c.l.b16 %v157
  %v1180 = vunpack.c.h.b16 %v157
  %v1181 = vunpack.c.l.b16 %v158
  %v1182 = vunpack.c.h.b16 %v158
  %v1183 = vunpack.c.l.b16 %v159
  %v1184 = vunpack.c.h.b16 %v159
  %v1185 = vunpack.c.l.b16 %v160
  %v1186 = vunpack.c.l.b16 %v161
  %v1187 = vunpack.c.h.b16 %v161
  %v1188 = vunpack.c.l.b16 %v162
  %v1189 = vunpack.c.h.b16 %v162
  %v1190 = vunpack.c.l.b16 %v163
  %v1191 = vunpack.c.h.b16 %v163
  %v1192 = vunpack.c.l.b16 %v164
  %v1193 = vunpack.c.l.b16 %v165
  %v1194 = vunpack.c.h.b16 %v165
  %v1195 = vunpack.c.l.b16 %v166
  %v1196 = vunpack.c.h.b16 %v166
  %v1197 = vunpack.c.l.b16 %v167
  %v1198 = vunpack.c.h.b16 %v167
  %v1199 = vunpack.c.l.b16 %v168
  %v1200 = vunpack.c.l.b16 %v169
  %v1201 = vunpack.c.h.b16 %v169
  %v1202 = vunpack.c.l.b16 %v170
  %v1203 = vunpack.c.h.b16 %v170
  %v1204 = vunpack.c.l.b16 %v171
  %v1205 = vunpack.c.h.b16 %v171
  %v1206 = vunpack.c.l.b16 %v172
  %v1207 = vunpack.c.l.b16 %v173
  %v1208 = vunpack.c.h.b16 %v173
  %v1209 = vunpack.c.l.b16 %v174
  %v1210 = vunpack.c.h.b16 %v174
  %v1211 = vunpack.c.l.b16 %v175
  %v1212 = vunpack.c.h.b16 %v175
  %v1213 = vunpack.c.l.b16 %v176
  %v1214 = vunpack.c.l.b16 %v177
  %v1215 = vunpack.c.h.b16 %v177
  %v1216 = vunpack.c.l.b16 %v178
  %v1217 = vunpack.c.h.b16 %v178
  %v1218 = vunpack.c.l.b16 %v179
  %v1219 = vunpack.c.h.b16 %v179
  %v1220 = vunpack.c.l.b16 %v180
  %v1221 = vunpack.c.l.b16 %v181
  %v1222 = vunpack.c.h.b16 %v181
  %v1223 = vunpack.c.l.b16 %v182
  %v1224 = vunpack.c.h.b16 %v182
  %v1225 = vunpack.c.l.b16 %v183
  %v1226 = vunpack.c.h.b16 %v183
  %v1227 = vunpack.c.l.b16 %v184
  %v1228 = vunpack.c.l.b16 %v185
  %v1229 = vunpack.c.h.b16 %v185
  %v1230 = vunpack.c.l.b16 %v186
  %v1231 = vunpack.c.h.b16 %v186
  %v1232 = vunpack.c.l.b16 %v187
  %v1233 = vunpack.c.h.b16 %v187
  %v1234 = vunpack.c.l.b16 %v188
  %v1235 = vunpack.c.l.b16 %v189
  %v1236 = vunpack.c.h.b16 %v189
  %v1237 = vunpack.c.l.b16 %v190
  %v1238 = vunpack.c.h.b16 %v190
  %v1239 = vunpack.c.l.b16 %v191
  %v1240 = vunpack.c.h.b16 %v191
  %v1241 = vunpack.c.l.b16 %v192
  %v1242 = vunpack.c.l.b16 %v193
  %v1243 = vunpack.c.h.b16 %v193
  %v1244 = vunpack.c.l.b16 %v194
  %v1245 = vunpack.c.h.b16 %v194
  %v1246 = vunpack.c.l.b16 %v195
  %v1247 = vunpack.c.h.b16 %v195
  %v1248 = vunpack.c.l.b16 %v196
  %v1249 = vunpack.c.l.b16 %v197
  %v1250 = vunpack.c.h.b16 %v197
  %v1251 = vunpack.c.l.b16 %v198
  %v1252 = vunpack.c.h.b16 %v198
  %v1253 = vunpack.c.l.b16 %v199
  %v1254 = vunpack.c.h.b16 %v199
  %v1255 = vunpack.c.l.b16 %v200
  %v1256 = vunpack.c.l.b16 %v201
  %v1257 = vunpack.c.h.b16 %v201
  %v1258 = vunpack.c.l.b16 %v202
  %v1259 = vunpack.c.h.b16 %v202
  %v1260 = vunpack.c.l.b16 %v203
  %v1261 = vunpack.c.h.b16 %v203
  %v1262 = vunpack.c.l.b16 %v204
  %v1263 = vunpack.c.l.b16 %v205
  %v1264 = vunpack.c.h.b16 %v205
  %v1265 = vunpack.c.l.b16 %v206
  %v1266 = vunpack.c.h.b16 %v206
  %v1267 = vunpack.c.l.b16 %v207
  %v1268 = vunpack.c.h.b16 %v207
  %v1269 = vunpack.c.l.b16 %v208
  %v1270 = vunpack.c.l.b16 %v209
  %v1271 = vunpack.c.h.b16 %v209
  %v1272 = vunpack.c.l.b16 %v210
  %v1273 = vunpack.c.h.b16 %v210
  %v1274 = vunpack.c.l.b16 %v211
  %v1275 = vunpack.c.h.b16 %v211
  %v1276 = vunpack.c.l.b16 %v212
  %v1277 = vunpack.c.l.b16 %v213
  %v1278 = vunpack.c.h.b16 %v213
  %v1279 = vunpack.c.l.b16 %v214
  %v1280 = vunpack.c.h.b16 %v214
  %v1281 = vunpack.c.l.b16 %v215
  %v1282 = vunpack.c.h.b16 %v215
  %v1283 = vunpack.c.l.b16 %v216
  %v1284 = vunpack.c.l.b16 %v217
  %v1285 = vunpack.c.h.b16 %v217
  %v1286 = vunpack.c.l.b16 %v218
  %v1287 = vunpack.c.h.b16 %v218
  %v1288 = vunpack.c.l.b16 %v219
  %v1289 = vunpack.c.h.b16 %v219
  %v1290 = vunpack.c.l.b16 %v220
  %v1291 = vunpack.c.l.b16 %v221
  %v1292 = vunpack.c.h.b16 %v221
  %v1293 = vunpack.c.l.b16 %v222
  %v1294 = vunpack.c.h.b16 %v222
  %v1295 = vunpack.c.l.b16 %v223
  %v1296 = vunpack.c.h.b16 %v223
  %v1297 = vunpack.c.l.b16 %v224
  %v1298 = vunpack.c.l.b16 %v225
  %v1299 = vunpack.c.h.b16 %v225
  %v1300 = vunpack.c.l.b16 %v226
  %v1301 = vunpack.c.h.b16 %v226
  %v1302 = vunpack.c.l.b16 %v227
  %v1303 = vunpack.c.h.b16 %v227
  %v1304 = vunpack.c.l.b16 %v228
  %v1305 = vunpack.c.l.b16 %v229
  %v1306 = vunpack.c.h.b16 %v229
  %v1307 = vunpack.c.l.b16 %v230
  %v1308 = vunpack.c.h.b16 %v230
  %v1309 = vunpack.c.l.b16 %v231
  %v1310 = vunpack.c.h.b16 %v231
  %v1311 = vunpack.c.l.b16 %v232
  %v1312 = vunpack.c.l.b16 %v233
  %v1313 = vunpack.c.h.b16 %v233
  %v1314 = vunpack.c.l.b16 %v234
  %v1315 = vunpack.c.h.b16 %v234
  %v1316 = vunpack.c.l.b16 %v235
  %v1317 = vunpack.c.h.b16 %v235
  %v1318 = vunpack.c.l.b16 %v236
  %v1319 = vunpack.c.l.b16 %v237
  %v1320 = vunpack.c.h.b16 %v237
  %v1321 = vunpack.c.l.b16 %v238
  %v1322 = vunpack.c.h.b16 %v238
  %v1323 = vunpack.c.l.b16 %v239
  %v1324 = vunpack.c.h.b16 %v239
  %v1325 = vunpack.c.l.b16 %v240
  %v1326 = vunpack.c.l.b16 %v241
  %v1327 = vunpack.c.h.b16 %v241
  %v1328 = vunpack.c.l.b16 %v242
  %v1329 = vunpack.c.h.b16 %v242
  %v1330 = vunpack.c.l.b16 %v243
  %v1331 = vunpack.c.h.b16 %v243
  %v1332 = vunpack.c.l.b16 %v244
  %v1333 = vunpack.c.l.b16 %v245
  %v1334 = vunpack.c.h.b16 %v245
  %v1335 = vunpack.c.l.b16 %v246
  %v1336 = vunpack.c.h.b16 %v246
  %v1337 = vunpack.c.l.b16 %v247
  %v1338 = vunpack.c.h.b16 %v247
  %v1339 = vunpack.c.l.b16 %v248
  %v1340 = vunpack.c.l.b16 %v249
  %v1341 = vunpack.c.h.b16 %v249
  %v1342 = vunpack.c.l.b16 %v250
  %v1343 = vunpack.c.h.b16 %v250
  %v1344 = vunpack.c.l.b16 %v251
  %v1345 = vunpack.c.h.b16 %v251
  %v1346 = vunpack.c.l.b16 %v252
  %v1347 = vunpack.c.l.b16 %v253
  %v1348 = vunpack.c.h.b16 %v253
  %v1349 = vunpack.c.l.b16 %v254
  %v1350 = vunpack.c.h.b16 %v254
  %v1351 = vunpack.c.l.b16 %v255
  %v1352 = vunpack.c.h.b16 %v255
  %v1353 = vunpack.c.l.b16 %v256
  %v1354 = vunpack.c.l.b16 %v257
  %v1355 = vunpack.c.h.b16 %v257
  %v1356 = vunpack.c.l.b16 %v258
  %v1357 = vunpack.c.h.b16 %v258
  %v1358 = vunpack.c.l.b16 %v259
  %v1359 = vunpack.c.h.b16 %v259
  %v1360 = vunpack.c.l.b16 %v260
  %v1361 = vunpack.c.l.b16 %v261
  %v1362 = vunpack.c.h.b16 %v261
  %v1363 = vunpack.c.l.b16 %v262
  %v1364 = vunpack.c.h.b16 %v262
  %v1365 = vunpack.c.l.b16 %v263
  %v1366 = vunpack.c.h.b16 %v263
  %v1367 = vunpack.c.l.b16 %v264
  %v1368 = vunpack.c.l.b16 %v265
  %v1369 = vunpack.c.h.b16 %v265
  %v1370 = vunpack.c.l.b16 %v266
  %v1371 = vunpack.c.h.b16 %v266
  %v1372 = vunpack.c.l.b16 %v267
  %v1373 = vunpack.c.h.b16 %v267
  %v1374 = vunpack.c.l.b16 %v268
  %v1375 = vunpack.c.l.b16 %v269
  %v1376 = vunpack.c.h.b16 %v269
  %v1377 = vunpack.c.l.b16 %v270
  %v1378 = vunpack.c.h.b16 %v270
  %v1379 = vunpack.c.l.b16 %v271
  %v1380 = vunpack.c.h.b16 %v271
  %v1381 = vunpack.c.l.b16 %v272
  %v1382 = vunpack.c.l.b16 %v273
  %v1383 = vunpack.c.h.b16 %v273
  %v1384 = vunpack.c.l.b16 %v274
  %v1385 = vunpack.c.h.b16 %v274
  %v1386 = vunpack.c.l.b16 %v275
  %v1387 = vunpack.c.h.b16 %v275
  %v1388 = vunpack.c.l.b16 %v276
  %v1389 = vunpack.c.l.b16 %v277
  %v1390 = vunpack.c.h.b16 %v277
  %v1391 = vunpack.c.l.b16 %v278
  %v1392 = vunpack.c.h.b16 %v278
  %v1393 = vunpack.c.l.b16 %v279
  %v1394 = vunpack.c.h.b16 %v279
  %v1395 = vunpack.c.l.b16 %v280
  %v1396 = vunpack.c.l.b16 %v281
  %v1397 = vunpack.c.h.b16 %v281
  %v1398 = vunpack.c.l.b16 %v282
  %v1399 = vunpack.c.h.b16 %v282
  %v1400 = vunpack.c.l.b16 %v283
  %v1401 = vunpack.c.h.b16 %v283
  %v1402 = vunpack.c.l.b16 %v284
  %v1403 = vunpack.c.l.b16 %v285
  %v1404 = vunpack.c.h.b16 %v285
  %v1405 = vunpack.c.l.b16 %v286
  %v1406 = vunpack.c.h.b16 %v286
  %v1407 = vunpack.c.l.b16 %v287
  %v1408 = vunpack.c.h.b16 %v287
  %v1409 = vunpack.c.l.b16 %v288
  %v1410 = vunpack.c.l.b16 %v289
  %v1411 = vunpack.c.h.b16 %v289
  %v1412 = vunpack.c.l.b16 %v290
  %v1413 = vunpack.c.h.b16 %v290
  %v1414 = vunpack.c.l.b16 %v291
  %v1415 = vunpack.c.h.b16 %v291
  %v1416 = vunpack.c.l.b16 %v292
  %v1417 = vunpack.c.l.b16 %v293
  %v1418 = vunpack.c.h.b16 %v293
  %v1419 = vunpack.c.l.b16 %v294
  %v1420 = vunpack.c.h.b16 %v294
  %v1421 = vunpack.c.l.b16 %v295
  %v1422 = vunpack.c.h.b16 %v295
  %v1423 = vunpack.c.l.b16 %v296
  %v1424 = vunpack.c.l.b16 %v297
  %v1425 = vunpack.c.h.b16 %v297
  %v1426 = vunpack.c.l.b16 %v298
  %v1427 = vunpack.c.h.b16 %v298
  %v1428 = vunpack.c.l.b16 %v299
  %v1429 = vunpack.c.h.b16 %v299
  %v1430 = vunpack.c.l.b16 %v300
  %v1431 = vunpack.c.l.b16 %v301
  %v1432 = vunpack.c.h.b16 %v301
  %v1433 = vunpack.c.l.b16 %v302
  %v1434 = vunpack.c.h.b16 %v302
  %v1435 = vunpack.c.l.b16 %v303
  %v1436 = vunpack.c.h.b16 %v303
  %v1437 = vunpack.c.l.b16 %v304
  %v1438 = vunpack.c.l.b16 %v305
  %v1439 = vunpack.c.h.b16 %v305
  %v1440 = vunpack.c.l.b16 %v306
  %v1441 = vunpack.c.h.b16 %v306
  %v1442 = vunpack.c.l.b16 %v307
  %v1443 = vunpack.c.h.b16 %v307
  %v1444 = vunpack.c.l.b16 %v308
  %v1445 = vunpack.c.l.b16 %v309
  %v1446 = vunpack.c.h.b16 %v309
  %v1447 = vunpack.c.l.b16 %v310
  %v1448 = vunpack.c.h.b16 %v310
  %v1449 = vunpack.c.l.b16 %v311
  %v1450 = vunpack.c.h.b16 %v311
  %v1451 = vunpack.c.l.b16 %v312
  %v1452 = vunpack.c.l.b16 %v313
  %v1453 = vunpack.c.h.b16 %v313
  %v1454 = vunpack.c.l.b16 %v314
  %v1455 = vunpack.c.h.b16 %v314
  %v1456 = vunpack.c.l.b16 %v315
  %v1457 = vunpack.c.h.b16 %v315
  %v1458 = vunpack.c.l.b16 %v316
  %v1459 = vunpack.c.l.b16 %v317
  %v1460 = vunpack.c.h.b16 %v317
  %v1461 = vunpack.c.l.b16 %v318
  %v1462 = vunpack.c.h.b16 %v318
  %v1463 = vunpack.c.l.b16 %v319
  %v1464 = vunpack.c.h.b16 %v319
  %v1465 = vunpack.c.l.b16 %v320
  %v1466 = vunpack.c.l.b16 %v321
  %v1467 = vunpack.c.h.b16 %v321
  %v1468 = vunpack.c.l.b16 %v322
  %v1469 = vunpack.c.h.b16 %v322
  %v1470 = vunpack.c.l.b16 %v323
  %v1471 = vunpack.c.h.b16 %v323
  %v1472 = vunpack.c.l.b16 %v324
  %v1473 = vunpack.c.l.b16 %v325
  %v1474 = vunpack.c.h.b16 %v325
  %v1475 = vunpack.c.l.b16 %v326
  %v1476 = vunpack.c.h.b16 %v326
  %v1477 = vunpack.c.l.b16 %v327
  %v1478 = vunpack.c.h.b16 %v327
  %v1479 = vunpack.c.l.b16 %v328
  %v1480 = vunpack.c.l.b16 %v329
  %v1481 = vunpack.c.h.b16 %v329
  %v1482 = vunpack.c.l.b16 %v330
  %v1483 = vunpack.c.h.b16 %v330
  %v1484 = vunpack.c.l.b16 %v331
  %v1485 = vunpack.c.h.b16 %v331
  %v1486 = vunpack.c.l.b16 %v332
  %v1487 = vunpack.c.l.b16 %v333
  %v1488 = vunpack.c.h.b16 %v333
  %v1489 = vunpack.c.l.b16 %v334
  %v1490 = vunpack.c.h.b16 %v334
  %v1491 = vunpack.c.l.b16 %v335
  %v1492 = vunpack.c.h.b16 %v335
  %v1493 = vunpack.c.l.b16 %v336
  %v1494 = vunpack.c.l.b16 %v337
  %v1495 = vunpack.c.h.b16 %v337
  %v1496 = vunpack.c.l.b16 %v338
  %v1497 = vunpack.c.h.b16 %v338
  %v1498 = vunpack.c.l.b16 %v339
  %v1499 = vunpack.c.h.b16 %v339
  %v1500 = vunpack.c.l.b16 %v340
  %v1501 = vunpack.c.l.b16 %v341
  %v1502 = vunpack.c.h.b16 %v341
  %v1503 = vunpack.c.l.b16 %v342
  %v1504 = vunpack.c.h.b16 %v342
  %v1505 = vunpack.c.l.b16 %v343
  %v1506 = vunpack.c.h.b16 %v343
  %v1507 = vunpack.c.l.b16 %v344
  %v1508 = vunpack.c.l.b16 %v345
  %v1509 = vunpack.c.h.b16 %v345
  %v1510 = vunpack.c.l.b16 %v346
  %v1511 = vunpack.c.h.b16 %v346
  %v1512 = vunpack.c.l.b16 %v347
  %v1513 = vunpack.c.h.b16 %v347
  %v1514 = vunpack.c.l.b16 %v348
  %v1515 = vunpack.c.l.b16 %v349
  %v1516 = vunpack.c.h.b16 %v349
  %v1517 = vunpack.c.l.b16 %v350
  %v1518 = vunpack.c.h.b16 %v350
  %v1519 = vunpack.c.l.b16 %v351
  %v1520 = vunpack.c.h.b16 %v351
  %v1521 = vunpack.c.l.b16 %v352
  %v1522 = vunpack.c.l.b16 %v353
  %v1523 = vunpack.c.h.b16 %v353
  %v1524 = vunpack.c.l.b16 %v354
  %v1525 = vunpack.c.h.b16 %v354
  %v1526 = vunpack.c.l.b16 %v355
  %v1527 = vunpack.c.h.b16 %v355
  %v1528 = vunpack.c.l.b16 %v356
  %v1529 = vunpack.c.l.b16 %v357
  %v1530 = vunpack.c.h.b16 %v357
  %v1531 = vunpack.c.l.b16 %v358
  %v1532 = vunpack.c.h.b16 %v358
  %v1533 = vunpack.c.l.b16 %v359
  %v1534 = vunpack.c.h.b16 %v359
  %v1535 = vunpack.c.l.b16 %v360
  %v1536 = vunpack.c.l.b16 %v361
  %v1537 = vunpack.c.h.b16 %v361
  %v1538 = vunpack.c.l.b16 %v362
  %v1539 = vunpack.c.h.b16 %v362
  %v1540 = vunpack.c.l.b16 %v363
  %v1541 = vunpack.c.h.b16 %v363
  %v1542 = vunpack.c.l.b16 %v364
  %v1543 = vunpack.c.l.b16 %v365
  %v1544 = vunpack.c.h.b16 %v365
  %v1545 = vunpack.c.l.b16 %v366
  %v1546 = vunpack.c.h.b16 %v366
  %v1547 = vunpack.c.l.b16 %v367
  %v1548 = vunpack.c.h.b16 %v367
  %v1549 = vunpack.c.l.b16 %v368
  %v1550 = vunpack.c.l.b16 %v369
  %v1551 = vunpack.c.h.b16 %v369
  %v1552 = vunpack.c.l.b16 %v370
  %v1553 = vunpack.c.h.b16 %v370
  %v1554 = vunpack.c.l.b16 %v371
  %v1555 = vunpack.c.h.b16 %v371
  %v1556 = vunpack.c.l.b16 %v372
  %v1557 = vunpack.c.l.b16 %v373
  %v1558 = vunpack.c.h.b16 %v373
  %v1559 = vunpack.c.l.b16 %v374
  %v1560 = vunpack.c.h.b16 %v374
  %v1561 = vunpack.c.l.b16 %v375
  %v1562 = vunpack.c.h.b16 %v375
  %v1563 = vunpack.c.l.b16 %v376
  %v1564 = vunpack.c.l.b16 %v377
  %v1565 = vunpack.c.h.b16 %v377
  %v1566 = vunpack.c.l.b16 %v378
  %v1567 = vunpack.c.h.b16 %v378
  %v1568 = vunpack.c.l.b16 %v379
  %v1569 = vunpack.c.h.b16 %v379
  %v1570 = vunpack.c.l.b16 %v380
  %v1571 = vunpack.c.l.b16 %v381
  %v1572 = vunpack.c.h.b16 %v381
  %v1573 = vunpack.c.l.b16 %v382
  %v1574 = vunpack.c.h.b16 %v382
  %v1575 = vunpack.c.l.b16 %v383
  %v1576 = vunpack.c.h.b16 %v383
  %v1577 = vunpack.c.l.b16 %v384
  %v1578 = vunpack.c.l.b16 %v385
  %v1579 = vunpack.c.h.b16 %v385
  %v1580 = vunpack.c.l.b16 %v386
  %v1581 = vunpack.c.h.b16 %v386
  %v1582 = vunpack.c.l.b16 %v387
  %v1583 = vunpack.c.h.b16 %v387
  %v1584 = vunpack.c.l.b16 %v388
  %v1585 = vunpack.c.l.b16 %v389
  %v1586 = vunpack.c.h.b16 %v389
  %v1587 = vunpack.c.l.b16 %v390
  %v1588 = vunpack.c.h.b16 %v390
  %v1589 = vunpack.c.l.b16 %v391
  %v1590 = vunpack.c.h.b16 %v391
  %v1591 = vunpack.c.l.b16 %v392
  %v1592 = vunpack.c.l.b16 %v393
  %v1593 = vunpack.c.h.b16 %v393
  %v1594 = vunpack.c.l.b16 %v394
  %v1595 = vunpack.c.h.b16 %v394
  %v1596 = vunpack.c.l.b16 %v395
  %v1597 = vunpack.c.h.b16 %v395
  %v1598 = vunpack.c.l.b16 %v396
  %v1599 = vunpack.c.l.b16 %v397
  %v1600 = vunpack.c.h.b16 %v397
  %v1601 = vunpack.c.l.b16 %v398
  %v1602 = vunpack.c.h.b16 %v398
  %v1603 = vunpack.c.l.b16 %v399
  %v1604 = vunpack.c.h.b16 %v399
  %v1605 = vunpack.c.l.b16 %v400
  %v1606 = vunpack.c.l.b16 %v401
  %v1607 = vunpack.c.h.b16 %v401
  %v1608 = vunpack.c.l.b16 %v402
  %v1609 = vunpack.c.h.b16 %v402
  %v1610 = vunpack.c.l.b16 %v403
  %v1611 = vunpack.c.h.b16 %v403
  %v1612 = vunpack.c.l.b16 %v404
  %v1613 = vunpack.c.l.b16 %v405
  %v1614 = vunpack.c.h.b16 %v405
  %v1615 = vunpack.c.l.b16 %v406
  %v1616 = vunpack.c.h.b16 %v406
  %v1617 = vunpack.c.l.b16 %v407
  %v1618 = vunpack.c.h.b16 %v407
  %v1619 = vunpack.c.l.b16 %v408
  %v1620 = vunpack.c.l.b16 %v409
  %v1621 = vunpack.c.h.b16 %v409
  %v1622 = vunpack.c.l.b16 %v410
  %v1623 = vunpack.c.h.b16 %v410
  %v1624 = vunpack.c.l.b16 %v411
  %v1625 = vunpack.c.h.b16 %v411
  %v1626 = vunpack.c.l.b16 %v412
  %v1627 = vunpack.c.l.b16 %v413
  %v1628 = vunpack.c.h.b16 %v413
  %v1629 = vunpack.c.l.b16 %v414
  %v1630 = vunpack.c.h.b16 %v414
  %v1631 = vunpack.c.l.b16 %v415
  %v1632 = vunpack.c.h.b16 %v415
  %v1633 = vunpack.c.l.b16 %v416
  %v1634 = vunpack.c.l.b16 %v417
  %v1635 = vunpack.c.h.b16 %v417
  %v1636 = vunpack.c.l.b16 %v418
  %v1637 = vunpack.c.h.b16 %v418
  %v1638 = vunpack.c.l.b16 %v419
  %v1639 = vunpack.c.h.b16 %v419
  %v1640 = vunpack.c.l.b16 %v420
  %v1641 = vunpack.c.l.b16 %v421
  %v1642 = vunpack.c.h.b16 %v421
  %v1643 = vunpack.c.l.b16 %v422
  %v1644 = vunpack.c.h.b16 %v422
  %v1645 = vunpack.c.l.b16 %v423
  %v1646 = vunpack.c.h.b16 %v423
  %v1647 = vunpack.c.l.b16 %v424
  %v1648 = vunpack.c.l.b16 %v425
  %v1649 = vunpack.c.h.b16 %v425
  %v1650 = vunpack.c.l.b16 %v426
  %v1651 = vunpack.c.h.b16 %v426
  %v1652 = vunpack.c.l.b16 %v427
  %v1653 = vunpack.c.h.b16 %v427
  %v1654 = vunpack.c.l.b16 %v428
  %v1655 = vunpack.c.l.b16 %v429
  %v1656 = vunpack.c.h.b16 %v429
  %v1657 = vunpack.c.l.b16 %v430
  %v1658 = vunpack.c.h.b16 %v430
  %v1659 = vunpack.c.l.b16 %v431
  %v1660 = vunpack.c.h.b16 %v431
  %v1661 = vunpack.c.l.b16 %v432
  %v1662 = vunpack.c.l.b16 %v433
  %v1663 = vunpack.c.h.b16 %v433
  %v1664 = vunpack.c.l.b16 %v434
  %v1665 = vunpack.c.h.b16 %v434
  %v1666 = vunpack.c.l.b16 %v435
  %v1667 = vunpack.c.h.b16 %v435
  %v1668 = vunpack.c.l.b16 %v436
  %v1669 = vunpack.c.l.b16 %v437
  %v1670 = vunpack.c.h.b16 %v437
  %v1671 = vunpack.c.l.b16 %v438
  %v1672 = vunpack.c.h.b16 %v438
  %v1673 = vunpack.c.l.b16 %v439
  %v1674 = vunpack.c.h.b16 %v439
  %v1675 = vunpack.c.l.b16 %v440
  %v1676 = vunpack.c.l.b16 %v441
  %v1677 = vunpack.c.h.b16 %v441
  %v1678 = vunpack.c.l.b16 %v442
  %v1679 = vunpack.c.h.b16 %v442
  %v1680 = vunpack.c.l.b16 %v443
  %v1681 = vunpack.c.h.b16 %v443
  %v1682 = vunpack.c.l.b16 %v444
  %v1683 = vunpack.c.l.b16 %v445
  %v1684 = vunpack.c.h.b16 %v445
  %v1685 = vunpack.c.l.b16 %v446
  %v1686 = vunpack.c.h.b16 %v446
  %v1687 = vunpack.c.l.b16 %v447
  %v1688 = vunpack.c.h.b16 %v447
  %v1689 = vunpack.c.l.b16 %v448
  %v1690 = vunpack.c.l.b16 %v449
  %v1691 = vunpack.c.h.b16 %v449
  %v1692 = vunpack.c.l.b16 %v450
  %v1693 = vunpack.c.h.b16 %v450
  %v1694 = vunpack.c.l.b16 %v451
  %v1695 = vunpack.c.h.b16 %v451
  %v1696 = vunpack.c.l.b16 %v452
  %v1697 = vunpack.c.l.b16 %v453
  %v1698 = vunpack.c.h.b16 %v453
  %v1699 = vunpack.c.l.b16 %v454
  %v1700 = vunpack.c.h.b16 %v454
  %v1701 = vunpack.c.l.b16 %v455
  %v1702 = vunpack.c.h.b16 %v455
  %v1703 = vunpack.c.l.b16 %v456
  %v1704 = vunpack.c.l.b16 %v457
  %v1705 = vunpack.c.h.b16 %v457
  %v1706 = vunpack.c.l.b16 %v458
  %v1707 = vunpack.c.h.b16 %v458
  %v1708 = vunpack.c.l.b16 %v459
  %v1709 = vunpack.c.h.b16 %v459
  %v1710 = vunpack.c.l.b16 %v460
  %v1711 = vunpack.c.l.b16 %v461
  %v1712 = vunpack.c.h.b16 %v461
  %v1713 = vunpack.c.l.b16 %v462
  %v1714 = vunpack.c.h.b16 %v462
  %v1715 = vunpack.c.l.b16 %v463
  %v1716 = vunpack.c.h.b16 %v463
  %v1717 = vunpack.c.l.b16 %v464
  %v1718 = vunpack.c.l.b16 %v465
  %v1719 = vunpack.c.h.b16 %v465
  %v1720 = vunpack.c.l.b16 %v466
  %v1721 = vunpack.c.h.b16 %v466
  %v1722 = vunpack.c.l.b16 %v467
  %v1723 = vunpack.c.h.b16 %v467
  %v1724 = vunpack.c.l.b16 %v468
  %v1725 = vunpack.c.l.b16 %v469
  %v1726 = vunpack.c.h.b16 %v469
  %v1727 = vunpack.c.l.b16 %v470
  %v1728 = vunpack.c.h.b16 %v470
  %v1729 = vunpack.c.l.b16 %v471
  %v1730 = vunpack.c.h.b16 %v471
  %v1731 = vunpack.c.l.b16 %v472
  %v1732 = vpack.c.b16 %v955, %v948
  %v1733 = vpack.c.b16 %v956, %v949
  %v1734 = vpack.c.b16 %v957, %v950
  %v1735 = vpack.c.b16 %v958, %v951
  %v1736 = vpack.c.b16 %v959, %v952
  %v1737 = vpack.c.b16 %v960, %v953
  %v1738 = vpack.c.b16 %v961, %v954
  %v1739 = vpack.c.b16 %v969, %v962
  %v1740 = vpack.c.b16 %v970, %v963
  %v1741 = vpack.c.b16 %v971, %v964
  %v1742 = vpack.c.b16 %v972, %v965
  %v1743 = vpack.c.b16 %v973, %v966
  %v1744 = vpack.c.b16 %v974, %v967
  %v1745 = vpack.c.b16 %v975, %v968
  %v1746 = vpack.c.b16 %v983, %v976
  %v1747 = vpack.c.b16 %v984, %v977
  %v1748 = vpack.c.b16 %v985, %v978
  %v1749 = vpack.c.b16 %v986, %v979
  %v1750 = vpack.c.b16 %v987, %v980
  %v1751 = vpack.c.b16 %v988, %v981
  %v1752 = vpack.c.b16 %v989, %v982
  %v1753 = vpack.c.b16 %v997, %v990
  %v1754 = vpack.c.b16 %v998, %v991
  %v1755 = vpack.c.b16 %v999, %v992
  %v1756 = vpack.c.b16 %v1000, %v993
  %v1757 = vpack.c.b16 %v1001, %v994
  %v1758 = vpack.c.b16 %v1002, %v995
  %v1759 = vpack.c.b16 %v1003, %v996
  %v1760 = vpack.c.b16 %v1011, %v1004
  %v1761 = vpack.c.b16 %v1012, %v1005
  %v1762 = vpack.c.b16 %v1013, %v1006
  %v1763 = vpack.c.b16 %v1014, %v1007
  %v1764 = vpack.c.b16 %v1015, %v1008
  %v1765 = vpack.c.b16 %v1016, %v1009
  %v1766 = vpack.c.b16 %v1017, %v1010
  %v1767 = vpack.c.b16 %v1025, %v1018
  %v1768 = vpack.c.b16 %v1026, %v1019
  %v1769 = vpack.c.b16 %v1027, %v1020
  %v1770 = vpack.c.b16 %v1028, %v1021
  %v1771 = vpack.c.b16 %v1029, %v1022
  %v1772 = vpack.c.b16 %v1030, %v1023
  %v1773 = vpack.c.b16 %v1031, %v1024
  %v1774 = vpack.c.b16 %v1039, %v1032
  %v1775 = vpack.c.b16 %v1040, %v1033
  %v1776 = vpack.c.b16 %v1041, %v1034
  %v1777 = vpack.c.b16 %v1042, %v1035
  %v1778 = vpack.c.b16 %v1043, %v1036
  %v1779 = vpack.c.b16 %v1044, %v1037
  %v1780 = vpack.c.b16 %v1045, %v1038
  %v1781 = vpack.c.b16 %v1053, %v1046
  %v1782 = vpack.c.b16 %v1054, %v1047
  %v1783 = vpack.c.b16 %v1055, %v1048
  %v1784 = vpack.c.b16 %v1056, %v1049
  %v1785 = vpack.c.b16 %v1057, %v1050
  %v1786 = vpack.c.b16 %v1058, %v1051
  %v1787 = vpack.c.b16 %v1059, %v1052
  %v1788 = vpack.c.b16 %v1067, %v1060
  %v1789 = vpack.c.b16 %v1068, %v1061
  %v1790 = vpack.c.b16 %v1069, %v1062
  %v1791 = vpack.c.b16 %v1070, %v1063
  %v1792 = vpack.c.b16 %v1071, %v1064
  %v1793 = vpack.c.b16 %v1072, %v1065
  %v1794 = vpack.c.b16 %v1073, %v1066
  %v1795 = vpack.c.b16 %v1081, %v1074
  %v1796 = vpack.c.b16 %v1082, %v1075
  %v1797 = vpack.c.b16 %v1083, %v1076
  %v1798 = vpack.c.b16 %v1084, %v1077
  %v1799 = vpack.c.b16 %v1085, %v1078
  %v1800 = vpack.c.b16 %v1086, %v1079
  %v1801 = vpack.c.b16 %v1087, %v1080
  %v1802 = vpack.c.b16 %v1095, %v1088
  %v1803 = vpack.c.b16 %v1096, %v1089
  %v1804 = vpack.c.b16 %v1097, %v1090
  %v1805 = vpack.c.b16 %v1098, %v1091
  %v1806 = vpack.c.b16 %v1099, %v1092
  %v1807 = vpack.c.b16 %v1100, %v1093
  %v1808 = vpack.c.b16 %v1101, %v1094
  %v1809 = vpack.c.b16 %v1109, %v1102
  %v1810 = vpack.c.b16 %v1110, %v1103
  %v1811 = vpack.c.b16 %v1111, %v1104
  %v1812 = vpack.c.b16 %v1112, %v1105
  %v1813 = vpack.c.b16 %v1113, %v1106
  %v1814 = vpack.c.b16 %v1114, %v1107
  %v1815 = vpack.c.b16 %v1115, %v1108
  %v1816 = vpack.c.b16 %v1123, %v1116
  %v1817 = vpack.c.b16 %v1124, %v1117
  %v1818 = vpack.c.b16 %v1125, %v1118
  %v1819 = vpack.c.b16 %v1126, %v1119
  %v1820 = vpack.c.b16 %v1127, %v1120
  %v1821 = vpack.c.b16 %v1128, %v1121
  %v1822 = vpack.c.b16 %v1129, %v1122
  %v1823 = vpack.c.b16 %v1137, %v1130
  %v1824 = vpack.c.b16 %v1138, %v1131
  %v1825 = vpack.c.b16 %v1139, %v1132
  %v1826 = vpack.c.b16 %v1140, %v1133
  %v1827 = vpack.c.b16 %v1141, %v1134
  %v1828 = vpack.c.b16 %v1142, %v1135
  %v1829 = vpack.c.b16 %v1143, %v1136
  %v1830 = vpack.c.b16 %v1151, %v1144
  %v1831 = vpack.c.b16 %v1152, %v1145
  %v1832 = vpack.c.b16 %v1153, %v1146
  %v1833 = vpack.c.b16 %v1154, %v1147
  %v1834 = vpack.c.b16 %v1155, %v1148
  %v1835 = vpack.c.b16 %v1156, %v1149
  %v1836 = vpack.c.b16 %v1157, %v1150
  %v1837 = vpack.c.b16 %v1165, %v1158
  %v1838 = vpack.c.b16 %v1166, %v1159
  %v1839 = vpack.c.b16 %v1167, %v1160
  %v1840 = vpack.c.b16 %v1168, %v1161
  %v1841 = vpack.c.b16 %v1169, %v1162
  %v1842 = vpack.c.b16 %v1170, %v1163
  %v1843 = vpack.c.b16 %v1171, %v1164
  %v1844 = vpack.c.b16 %v1179, %v1172
  %v1845 = vpack.c.b16 %v1180, %v1173
  %v1846 = vpack.c.b16 %v1181, %v1174
  %v1847 = vpack.c.b16 %v1182, %v1175
  %v1848 = vpack.c.b16 %v1183, %v1176
  %v1849 = vpack.c.b16 %v1184, %v1177
  %v1850 = vpack.c.b16 %v1185, %v1178
  %v1851 = vpack.c.b16 %v1193, %v1186
  %v1852 = vpack.c.b16 %v1194, %v1187
  %v1853 = vpack.c.b16 %v1195, %v1188
  %v1854 = vpack.c.b16 %v1196, %v1189
  %v1855 = vpack.c.b16 %v1197, %v1190
  %v1856 = vpack.c.b16 %v1198, %v1191
  %v1857 = vpack.c.b16 %v1199, %v1192
  %v1858 = vpack.c.b16 %v1207, %v1200
  %v1859 = vpack.c.b16 %v1208, %v1201
  %v1860 = vpack.c.b16 %v1209, %v1202
  %v1861 = vpack.c.b16 %v1210, %v1203
  %v1862 = vpack.c.b16 %v1211, %v1204
  %v1863 = vpack.c.b16 %v1212, %v1205
  %v1864 = vpack.c.b16 %v1213, %v1206
  %v1865 = vpack.c.b16 %v1221, %v1214
  %v1866 = vpack.c.b16 %v1222, %v1215
  %v1867 = vpack.c.b16 %v1223, %v1216
  %v1868 = vpack.c.b16 %v1224, %v1217
  %v1869 = vpack.c.b16 %v1225, %v1218
  %v1870 = vpack.c.b16 %v1226, %v1219
  %v1871 = vpack.c.b16 %v1227, %v1220
  %v1872 = vpack.c.b16 %v1235, %v1228
  %v1873 = vpack.c.b16 %v1236, %v1229
  %v1874 = vpack.c.b16 %v1237, %v1230
  %v1875 = vpack.c.b16 %v1238, %v1231
  %v1876 = vpack.c.b16 %v1239, %v1232
  %v1877 = vpack.c.b16 %v1240, %v1233
  %v1878 = vpack.c.b16 %v1241, %v1234
  %v1879 = vpack.c.b16 %v1249, %v1242
  %v1880 = vpack.c.b16 %v1250, %v1243
  %v1881 = vpack.c.b16 %v1251, %v1244
  %v1882 = vpack.c.b16 %v1252, %v1245
  %v1883 = vpack.c.b16 %v1253, %v1246
  %v1884 = vpack.c.b16 %v1254, %v1247
  %v1885 = vpack.c.b16 %v1255, %v1248
  %v1886 = vpack.c.b16 %v1263, %v1256
  %v1887 = vpack.c.b16 %v1264, %v1257
  %v1888 = vpack.c.b16 %v1265, %v1258
  %v1889 = vpack.c.b16 %v1266, %v1259
  %v1890 = vpack.c.b16 %v1267, %v1260
  %v1891 = vpack.c.b16 %v1268, %v1261
  %v1892 = vpack.c.b16 %v1269, %v1262
  %v1893 = vpack.c.b16 %v1277, %v1270
  %v1894 = vpack.c.b16 %v1278, %v1271
  %v1895 = vpack.c.b16 %v1279, %v1272
  %v1896 = vpack.c.b16 %v1280, %v1273
  %v1897 = vpack.c.b16 %v1281, %v1274
  %v1898 = vpack.c.b16 %v1282, %v1275
  %v1899 = vpack.c.b16 %v1283, %v1276
  %v1900 = vpack.c.b16 %v1291, %v1284
  %v1901 = vpack.c.b16 %v1292, %v1285
  %v1902 = vpack.c.b16 %v1293, %v1286
  %v1903 = vpack.c.b16 %v1294, %v1287
  %v1904 = vpack.c.b16 %v1295, %v1288
  %v1905 = vpack.c.b16 %v1296, %v1289
  %v1906 = vpack.c.b16 %v1297, %v1290
  %v1907 = vpack.c.b16 %v1305, %v1298
  %v1908 = vpack.c.b16 %v1306, %v1299
  %v1909 = vpack.c.b16 %v1307, %v1300
  %v1910 = vpack.c.b16 %v1308, %v1301
  %v1911 = vpack.c.b16 %v1309, %v1302
  %v1912 = vpack.c.b16 %v1310, %v1303
  %v1913 = vpack.c.b16 %v1311, %v1304
  %v1914 = vpack.c.b16 %v1319, %v1312
  %v1915 = vpack.c.b16 %v1320, %v1313
  %v1916 = vpack.c.b16 %v1321, %v1314
  %v1917 = vpack.c.b16 %v1322, %v1315
  %v1918 = vpack.c.b16 %v1323, %v1316
  %v1919 = vpack.c.b16 %v1324, %v1317
  %v1920 = vpack.c.b16 %v1325, %v1318
  %v1921 = vpack.c.b16 %v1333, %v1326
  %v1922 = vpack.c.b16 %v1334, %v1327
  %v1923 = vpack.c.b16 %v1335, %v1328
  %v1924 = vpack.c.b16 %v1336, %v1329
  %v1925 = vpack.c.b16 %v1337, %v1330
  %v1926 = vpack.c.b16 %v1338, %v1331
  %v1927 = vpack.c.b16 %v1339, %v1332
  %v1928 = vpack.c.b16 %v1347, %v1340
  %v1929 = vpack.c.b16 %v1348, %v1341
  %v1930 = vpack.c.b16 %v1349, %v1342
  %v1931 = vpack.c.b16 %v1350, %v1343
  %v1932 = vpack.c.b16 %v1351, %v1344
  %v1933 = vpack.c.b16 %v1352, %v1345
  %v1934 = vpack.c.b16 %v1353, %v1346
  %v1935 = vpack.c.b16 %v1361, %v1354
  %v1936 = vpack.c.b16 %v1362, %v1355
  %v1937 = vpack.c.b16 %v1363, %v1356
  %v1938 = vpack.c.b16 %v1364, %v1357
  %v1939 = vpack.c.b16 %v1365, %v1358
  %v1940 = vpack.c.b16 %v1366, %v1359
  %v1941 = vpack.c.b16 %v1367, %v1360
  %v1942 = vpack.c.b16 %v1375, %v1368
  %v1943 = vpack.c.b16 %v1376, %v1369
  %v1944 = vpack.c.b16 %v1377, %v1370
  %v1945 = vpack.c.b16 %v1378, %v1371
  %v1946 = vpack.c.b16 %v1379, %v1372
  %v1947 = vpack.c.b16 %v1380, %v1373
  %v1948 = vpack.c.b16 %v1381, %v1374
  %v1949 = vpack.c.b16 %v1389, %v1382
  %v1950 = vpack.c.b16 %v1390, %v1383
  %v1951 = vpack.c.b16 %v1391, %v1384
  %v1952 = vpack.c.b16 %v1392, %v1385
  %v1953 = vpack.c.b16 %v1393, %v1386
  %v1954 = vpack.c.b16 %v1394, %v1387
  %v1955 = vpack.c.b16 %v1395, %v1388
  %v1956 = vpack.c.b16 %v1403, %v1396
  %v1957 = vpack.c.b16 %v1404, %v1397
  %v1958 = vpack.c.b16 %v1405, %v1398
  %v1959 = vpack.c.b16 %v1406, %v1399
  %v1960 = vpack.c.b16 %v1407, %v1400
  %v1961 = vpack.c.b16 %v1408, %v1401
  %v1962 = vpack.c.b16 %v1409, %v1402
  %v1963 = vpack.c.b16 %v1417, %v1410
  %v1964 = vpack.c.b16 %v1418, %v1411
  %v1965 = vpack.c.b16 %v1419, %v1412
  %v1966 = vpack.c.b16 %v1420, %v1413
  %v1967 = vpack.c.b16 %v1421, %v1414
  %v1968 = vpack.c.b16 %v1422, %v1415
  %v1969 = vpack.c.b16 %v1423, %v1416
  %v1970 = vpack.c.b16 %v1431, %v1424
  %v1971 = vpack.c.b16 %v1432, %v1425
  %v1972 = vpack.c.b16 %v1433, %v1426
  %v1973 = vpack.c.b16 %v1434, %v1427
  %v1974 = vpack.c.b16 %v1435, %v1428
  %v1975 = vpack.c.b16 %v1436, %v1429
  %v1976 = vpack.c.b16 %v1437, %v1430
  %v1977 = vpack.c.b16 %v1445, %v1438
  %v1978 = vpack.c.b16 %v1446, %v1439
  %v1979 = vpack.c.b16 %v1447, %v1440
  %v1980 = vpack.c.b16 %v1448, %v1441
  %v1981 = vpack.c.b16 %v1449, %v1442
  %v1982 = vpack.c.b16 %v1450, %v1443
  %v1983 = vpack.c.b16 %v1451, %v1444
  %v1984 = vpack.c.b16 %v1459, %v1452
  %v1985 = vpack.c.b16 %v1460, %v1453
  %v1986 = vpack.c.b16 %v1461, %v1454
  %v1987 = vpack.c.b16 %v1462, %v1455
  %v1988 = vpack.c.b16 %v1463, %v1456
  %v1989 = vpack.c.b16 %v1464, %v1457
  %v1990 = vpack.c.b16 %v1465, %v1458
  %v1991 = vpack.c.b16 %v1473, %v1466
  %v1992 = vpack.c.b16 %v1474, %v1467
  %v1993 = vpack.c.b16 %v1475, %v1468
  %v1994 = vpack.c.b16 %v1476, %v1469
  %v1995 = vpack.c.b16 %v1477, %v1470
  %v1996 = vpack.c.b16 %v1478, %v1471
  %v1997 = vpack.c.b16 %v1479, %v1472
  %v1998 = vpack.c.b16 %v1487, %v1480
  %v1999 = vpack.c.b16 %v1488, %v1481
  %v2000 = vpack.c.b16 %v1489, %v1482
  %v2001 = vpack.c.b16 %v1490, %v1483
  %v2002 = vpack.c.b16 %v1491, %v1484
  %v2003 = vpack.c.b16 %v1492, %v1485
  %v2004 = vpack.c.b16 %v1493, %v1486
  %v2005 = vpack.c.b16 %v1501, %v1494
  %v2006 = vpack.c.b16 %v1502, %v1495
  %v2007 = vpack.c.b16 %v1503, %v1496
  %v2008 = vpack.c.b16 %v1504, %v1497
  %v2009 = vpack.c.b16 %v1505, %v1498
  %v2010 = vpack.c.b16 %v1506, %v1499
  %v2011 = vpack.c.b16 %v1507, %v1500
  %v2012 = vpack.c.b16 %v1515, %v1508
  %v2013 = vpack.c.b16 %v1516, %v1509
  %v2014 = vpack.c.b16 %v1517, %v1510
  %v2015 = vpack.c.b16 %v1518, %v1511
  %v2016 = vpack.c.b16 %v1519, %v1512
  %v2017 = vpack.c.b16 %v1520, %v1513
  %v2018 = vpack.c.b16 %v1521, %v1514
  %v2019 = vpack.c.b16 %v1529, %v1522
  %v2020 = vpack.c.b16 %v1530, %v1523
  %v2021 = vpack.c.b16 %v1531, %v1524
  %v2022 = vpack.c.b16 %v1532, %v1525
  %v2023 = vpack.c.b16 %v1533, %v1526
  %v2024 = vpack.c.b16 %v1534, %v1527
  %v2025 = vpack.c.b16 %v1535, %v1528
  %v2026 = vpack.c.b16 %v1543, %v1536
  %v2027 = vpack.c.b16 %v1544, %v1537
  %v2028 = vpack.c.b16 %v1545, %v1538
  %v2029 = vpack.c.b16 %v1546, %v1539
  %v2030 = vpack.c.b16 %v1547, %v1540
  %v2031 = vpack.c.b16 %v1548, %v1541
  %v2032 = vpack.c.b16 %v1549, %v1542
  %v2033 = vpack.c.b16 %v1557, %v1550
  %v2034 = vpack.c.b16 %v1558, %v1551
  %v2035 = vpack.c.b16 %v1559, %v1552
  %v2036 = vpack.c.b16 %v1560, %v1553
  %v2037 = vpack.c.b16 %v1561, %v1554
  %v2038 = vpack.c.b16 %v1562, %v1555
  %v2039 = vpack.c.b16 %v1563, %v1556
  %v2040 = vpack.c.b16 %v1571, %v1564
  %v2041 = vpack.c.b16 %v1572, %v1565
  %v2042 = vpack.c.b16 %v1573, %v1566
  %v2043 = vpack.c.b16 %v1574, %v1567
  %v2044 = vpack.c.b16 %v1575, %v1568
  %v2045 = vpack.c.b16 %v1576, %v1569
  %v2046 = vpack.c.b16 %v1577, %v1570
  %v2047 = vpack.c.b16 %v1585, %v1578
  %v2048 = vpack.c.b16 %v1586, %v1579
  %v2049 = vpack.c.b16 %v1587, %v1580
  %v2050 = vpack.c.b16 %v1588, %v1581
  %v2051 = vpack.c.b16 %v1589, %v1582
  %v2052 = vpack.c.b16 %v1590, %v1583
  %v2053 = vpack.c.b16 %v1591, %v1584
  %v2054 = vpack.c.b16 %v1599, %v1592
  %v2055 = vpack.c.b16 %v1600, %v1593
  %v2056 = vpack.c.b16 %v1601, %v1594
  %v2057 = vpack.c.b16 %v1602, %v1595
  %v2058 = vpack.c.b16 %v1603, %v1596
  %v2059 = vpack.c.b16 %v1604, %v1597
  %v2060 = vpack.c.b16 %v1605, %v1598
  %v2061 = vpack.c.b16 %v1613, %v1606
  %v2062 = vpack.c.b16 %v1614, %v1607
  %v2063 = vpack.c.b16 %v1615, %v1608
  %v2064 = vpack.c.b16 %v1616, %v1609
  %v2065 = vpack.c.b16 %v1617, %v1610
  %v2066 = vpack.c.b16 %v1618, %v1611
  %v2067 = vpack.c.b16 %v1619, %v1612
  %v2068 = vpack.c.b16 %v1627, %v1620
  %v2069 = vpack.c.b16 %v1628, %v1621
  %v2070 = vpack.c.b16 %v1629, %v1622
  %v2071 = vpack.c.b16 %v1630, %v1623
  %v2072 = vpack.c.b16 %v1631, %v1624
  %v2073 = vpack.c.b16 %v1632, %v1625
  %v2074 = vpack.c.b16 %v1633, %v1626
  %v2075 = vpack.c.b16 %v1641, %v1634
  %v2076 = vpack.c.b16 %v1642, %v1635
  %v2077 = vpack.c.b16 %v1643, %v1636
  %v2078 = vpack.c.b16 %v1644, %v1637
  %v2079 = vpack.c.b16 %v1645, %v1638
  %v2080 = vpack.c.b16 %v1646, %v1639
  %v2081 = vpack.c.b16 %v1647, %v1640
  %v2082 = vpack.c.b16 %v1655, %v1648
  %v2083 = vpack.c.b16 %v1656, %v1649
  %v2084 = vpack.c.b16 %v1657, %v1650
  %v2085 = vpack.c.b16 %v1658, %v1651
  %v2086 = vpack.c.b16 %v1659, %v1652
  %v2087 = vpack.c.b16 %v1660, %v1653
  %v2088 = vpack.c.b16 %v1661, %v1654
  %v2089 = vpack.c.b16 %v1669, %v1662
  %v2090 = vpack.c.b16 %v1670, %v1663
  %v2091 = vpack.c.b16 %v1671, %v1664
  %v2092 = vpack.c.b16 %v1672, %v1665
  %v2093 = vpack.c.b16 %v1673, %v1666
  %v2094 = vpack.c.b16 %v1674, %v1667
  %v2095 = vpack.c.b16 %v1675, %v1668
  %v2096 = vpack.c.b16 %v1683, %v1676
  %v2097 = vpack.c.b16 %v1684, %v1677
  %v2098 = vpack.c.b16 %v1685, %v1678
  %v2099 = vpack.c.b16 %v1686, %v1679
  %v2100 = vpack.c.b16 %v1687, %v1680
  %v2101 = vpack.c.b16 %v1688, %v1681
  %v2102 = vpack.c.b16 %v1689, %v1682
  %v2103 = vpack.c.b16 %v1697, %v1690
  %v2104 = vpack.c.b16 %v1698, %v1691
  %v2105 = vpack.c.b16 %v1699, %v1692
  %v2106 = vpack.c.b16 %v1700, %v1693
  %v2107 = vpack.c.b16 %v1701, %v1694
  %v2108 = vpack.c.b16 %v1702, %v1695
  %v2109 = vpack.c.b16 %v1703, %v1696
  %v2110 = vpack.c.b16 %v1711, %v1704
  %v2111 = vpack.c.b16 %v1712, %v1705
  %v2112 = vpack.c.b16 %v1713, %v1706
  %v2113 = vpack.c.b16 %v1714, %v1707
  %v2114 = vpack.c.b16 %v1715, %v1708
  %v2115 = vpack.c.b16 %v1716, %v1709
  %v2116 = vpack.c.b16 %v1717, %v1710
  %v2117 = vpack.c.b16 %v1725, %v1718
  %v2118 = vpack.c.b16 %v1726, %v1719
  %v2119 = vpack.c.b16 %v1727, %v1720
  %v2120 = vpack.c.b16 %v1728, %v1721
  %v2121 = vpack.c.b16 %v1729, %v1722
  %v2122 = vpack.c.b16 %v1730, %v1723
  %v2123 = vpack.c.b16 %v1731, %v1724
  %2516 = vmatpush.bf16.msra.mxu0 %v1781
  %2517 = vmatpush.bf16.msra.mxu0 %v1774
  %2518 = vmatpush.bf16.msra.mxu0 %v1767
  %2519 = vmatpush.bf16.msra.mxu0 %v1760
  %2520 = vmatpush.bf16.msra.mxu0 %v1753
  %2521 = vmatpush.bf16.msra.mxu0 %v1746
  %2522 = vmatpush.bf16.msra.mxu0 %v1739
  %2523 = vmatpush.bf16.msra.mxu0 %v1732
  %2524 = vmatmul.bf16.gmra.mxu0 %v486
  %v2525 = vpop.f32.mrf.mxu0
  %v2526 = vadd.f32 %v474, %v2525
  %v2527 = vpop.f32.mrf.mxu0
  %2528 = vdwg.mxu0
  %2529 = vmatpush.bf16.msra.mxu0 %v1837
  %2530 = vmatpush.bf16.msra.mxu0 %v1830
  %2531 = vmatpush.bf16.msra.mxu0 %v1823
  %2532 = vmatpush.bf16.msra.mxu0 %v1816
  %2533 = vmatpush.bf16.msra.mxu0 %v1809
  %2534 = vmatpush.bf16.msra.mxu0 %v1802
  %2535 = vmatpush.bf16.msra.mxu0 %v1795
  %2536 = vmatpush.bf16.msra.mxu0 %v1788
  %2537 = vmatmul.bf16.gmra.mxu0 %v487
  %v2538 = vpop.f32.mrf.mxu0
  %v2539 = vadd.f32 %v2526, %v2538
  %v2540 = vpop.f32.mrf.mxu0
  %2541 = vdwg.mxu0
  %2542 = vmatpush.bf16.msra.mxu0 %v1893
  %2543 = vmatpush.bf16.msra.mxu0 %v1886
  %2544 = vmatpush.bf16.msra.mxu0 %v1879
  %2545 = vmatpush.bf16.msra.mxu0 %v1872
  %2546 = vmatpush.bf16.msra.mxu0 %v1865
  %2547 = vmatpush.bf16.msra.mxu0 %v1858
  %2548 = vmatpush.bf16.msra.mxu0 %v1851
  %2549 = vmatpush.bf16.msra.mxu0 %v1844
  %2550 = vmatmul.bf16.gmra.mxu0 %v488
  %v2551 = vpop.f32.mrf.mxu0
  %v2552 = vadd.f32 %v2539, %v2551
  %v2553 = vpop.f32.mrf.mxu0
  %2554 = vdwg.mxu0
  %2555 = vmatpush.bf16.msra.mxu0 %v1949
  %2556 = vmatpush.bf16.msra.mxu0 %v1942
  %2557 = vmatpush.bf16.msra.mxu0 %v1935
  %2558 = vmatpush.bf16.msra.mxu0 %v1928
  %2559 = vmatpush.bf16.msra.mxu0 %v1921
  %2560 = vmatpush.bf16.msra.mxu0 %v1914
  %2561 = vmatpush.bf16.msra.mxu0 %v1907
  %2562 = vmatpush.bf16.msra.mxu0 %v1900
  %2563 = vmatmul.bf16.gmra.mxu0 %v489
  %v2564 = vpop.f32.mrf.mxu0
  %v2565 = vadd.f32 %v2552, %v2564
  %v2566 = vpop.f32.mrf.mxu0
  %2567 = vdwg.mxu0
  %2568 = vmatpush.bf16.msra.mxu0 %v2005
  %2569 = vmatpush.bf16.msra.mxu0 %v1998
  %2570 = vmatpush.bf16.msra.mxu0 %v1991
  %2571 = vmatpush.bf16.msra.mxu0 %v1984
  %2572 = vmatpush.bf16.msra.mxu0 %v1977
  %2573 = vmatpush.bf16.msra.mxu0 %v1970
  %2574 = vmatpush.bf16.msra.mxu0 %v1963
  %2575 = vmatpush.bf16.msra.mxu0 %v1956
  %2576 = vmatmul.bf16.gmra.mxu0 %v490
  %v2577 = vpop.f32.mrf.mxu0
  %v2578 = vadd.f32 %v2565, %v2577
  %v2579 = vpop.f32.mrf.mxu0
  %2580 = vdwg.mxu0
  %2581 = vmatpush.bf16.msra.mxu0 %v2061
  %2582 = vmatpush.bf16.msra.mxu0 %v2054
  %2583 = vmatpush.bf16.msra.mxu0 %v2047
  %2584 = vmatpush.bf16.msra.mxu0 %v2040
  %2585 = vmatpush.bf16.msra.mxu0 %v2033
  %2586 = vmatpush.bf16.msra.mxu0 %v2026
  %2587 = vmatpush.bf16.msra.mxu0 %v2019
  %2588 = vmatpush.bf16.msra.mxu0 %v2012
  %2589 = vmatmul.bf16.gmra.mxu0 %v491
  %v2590 = vpop.f32.mrf.mxu0
  %v2591 = vadd.f32 %v2578, %v2590
  %v2592 = vpop.f32.mrf.mxu0
  %2593 = vdwg.mxu0
  %2594 = vmatpush.bf16.msra.mxu0 %v2117
  %2595 = vmatpush.bf16.msra.mxu0 %v2110
  %2596 = vmatpush.bf16.msra.mxu0 %v2103
  %2597 = vmatpush.bf16.msra.mxu0 %v2096
  %2598 = vmatpush.bf16.msra.mxu0 %v2089
  %2599 = vmatpush.bf16.msra.mxu0 %v2082
  %2600 = vmatpush.bf16.msra.mxu0 %v2075
  %2601 = vmatpush.bf16.msra.mxu0 %v2068
  %2602 = vmatmul.bf16.gmra.mxu0 %v492
  %v2603 = vpop.f32.mrf.mxu0
  %v2604 = vadd.f32 %v2591, %v2603
  %v2605 = vpop.f32.mrf.mxu0
  %2606 = vdwg.mxu0
  %2607 = vmatpush.bf16.msra.mxu0 %v1782
  %2608 = vmatpush.bf16.msra.mxu0 %v1775
  %2609 = vmatpush.bf16.msra.mxu0 %v1768
  %2610 = vmatpush.bf16.msra.mxu0 %v1761
  %2611 = vmatpush.bf16.msra.mxu0 %v1754
  %2612 = vmatpush.bf16.msra.mxu0 %v1747
  %2613 = vmatpush.bf16.msra.mxu0 %v1740
  %2614 = vmatpush.bf16.msra.mxu0 %v1733
  %2615 = vmatmul.bf16.gmra.mxu0 %v486
  %v2616 = vpop.f32.mrf.mxu0
  %v2617 = vadd.f32 %v474, %v2616
  %v2618 = vpop.f32.mrf.mxu0
  %2619 = vdwg.mxu0
  %2620 = vmatpush.bf16.msra.mxu0 %v1838
  %2621 = vmatpush.bf16.msra.mxu0 %v1831
  %2622 = vmatpush.bf16.msra.mxu0 %v1824
  %2623 = vmatpush.bf16.msra.mxu0 %v1817
  %2624 = vmatpush.bf16.msra.mxu0 %v1810
  %2625 = vmatpush.bf16.msra.mxu0 %v1803
  %2626 = vmatpush.bf16.msra.mxu0 %v1796
  %2627 = vmatpush.bf16.msra.mxu0 %v1789
  %2628 = vmatmul.bf16.gmra.mxu0 %v487
  %v2629 = vpop.f32.mrf.mxu0
  %v2630 = vadd.f32 %v2617, %v2629
  %v2631 = vpop.f32.mrf.mxu0
  %2632 = vdwg.mxu0
  %2633 = vmatpush.bf16.msra.mxu0 %v1894
  %2634 = vmatpush.bf16.msra.mxu0 %v1887
  %2635 = vmatpush.bf16.msra.mxu0 %v1880
  %2636 = vmatpush.bf16.msra.mxu0 %v1873
  %2637 = vmatpush.bf16.msra.mxu0 %v1866
  %2638 = vmatpush.bf16.msra.mxu0 %v1859
  %2639 = vmatpush.bf16.msra.mxu0 %v1852
  %2640 = vmatpush.bf16.msra.mxu0 %v1845
  %2641 = vmatmul.bf16.gmra.mxu0 %v488
  %v2642 = vpop.f32.mrf.mxu0
  %v2643 = vadd.f32 %v2630, %v2642
  %v2644 = vpop.f32.mrf.mxu0
  %2645 = vdwg.mxu0
  %2646 = vmatpush.bf16.msra.mxu0 %v1950
  %2647 = vmatpush.bf16.msra.mxu0 %v1943
  %2648 = vmatpush.bf16.msra.mxu0 %v1936
  %2649 = vmatpush.bf16.msra.mxu0 %v1929
  %2650 = vmatpush.bf16.msra.mxu0 %v1922
  %2651 = vmatpush.bf16.msra.mxu0 %v1915
  %2652 = vmatpush.bf16.msra.mxu0 %v1908
  %2653 = vmatpush.bf16.msra.mxu0 %v1901
  %2654 = vmatmul.bf16.gmra.mxu0 %v489
  %v2655 = vpop.f32.mrf.mxu0
  %v2656 = vadd.f32 %v2643, %v2655
  %v2657 = vpop.f32.mrf.mxu0
  %2658 = vdwg.mxu0
  %2659 = vmatpush.bf16.msra.mxu0 %v2006
  %2660 = vmatpush.bf16.msra.mxu0 %v1999
  %2661 = vmatpush.bf16.msra.mxu0 %v1992
  %2662 = vmatpush.bf16.msra.mxu0 %v1985
  %2663 = vmatpush.bf16.msra.mxu0 %v1978
  %2664 = vmatpush.bf16.msra.mxu0 %v1971
  %2665 = vmatpush.bf16.msra.mxu0 %v1964
  %2666 = vmatpush.bf16.msra.mxu0 %v1957
  %2667 = vmatmul.bf16.gmra.mxu0 %v490
  %v2668 = vpop.f32.mrf.mxu0
  %v2669 = vadd.f32 %v2656, %v2668
  %v2670 = vpop.f32.mrf.mxu0
  %2671 = vdwg.mxu0
  %2672 = vmatpush.bf16.msra.mxu0 %v2062
  %2673 = vmatpush.bf16.msra.mxu0 %v2055
  %2674 = vmatpush.bf16.msra.mxu0 %v2048
  %2675 = vmatpush.bf16.msra.mxu0 %v2041
  %2676 = vmatpush.bf16.msra.mxu0 %v2034
  %2677 = vmatpush.bf16.msra.mxu0 %v2027
  %2678 = vmatpush.bf16.msra.mxu0 %v2020
  %2679 = vmatpush.bf16.msra.mxu0 %v2013
  %2680 = vmatmul.bf16.gmra.mxu0 %v491
  %v2681 = vpop.f32.mrf.mxu0
  %v2682 = vadd.f32 %v2669, %v2681
  %v2683 = vpop.f32.mrf.mxu0
  %2684 = vdwg.mxu0
  %2685 = vmatpush.bf16.msra.mxu0 %v2118
  %2686 = vmatpush.bf16.msra.mxu0 %v2111
  %2687 = vmatpush.bf16.msra.mxu0 %v2104
  %2688 = vmatpush.bf16.msra.mxu0 %v2097
  %2689 = vmatpush.bf16.msra.mxu0 %v2090
  %2690 = vmatpush.bf16.msra.mxu0 %v2083
  %2691 = vmatpush.bf16.msra.mxu0 %v2076
  %2692 = vmatpush.bf16.msra.mxu0 %v2069
  %2693 = vmatmul.bf16.gmra.mxu0 %v492
  %v2694 = vpop.f32.mrf.mxu0
  %v2695 = vadd.f32 %v2682, %v2694
  %v2696 = vpop.f32.mrf.mxu0
  %2697 = vdwg.mxu0
  %2698 = vmatpush.bf16.msra.mxu0 %v1783
  %2699 = vmatpush.bf16.msra.mxu0 %v1776
  %2700 = vmatpush.bf16.msra.mxu0 %v1769
  %2701 = vmatpush.bf16.msra.mxu0 %v1762
  %2702 = vmatpush.bf16.msra.mxu0 %v1755
  %2703 = vmatpush.bf16.msra.mxu0 %v1748
  %2704 = vmatpush.bf16.msra.mxu0 %v1741
  %2705 = vmatpush.bf16.msra.mxu0 %v1734
  %2706 = vmatmul.bf16.gmra.mxu0 %v486
  %v2707 = vpop.f32.mrf.mxu0
  %v2708 = vadd.f32 %v474, %v2707
  %v2709 = vpop.f32.mrf.mxu0
  %2710 = vdwg.mxu0
  %2711 = vmatpush.bf16.msra.mxu0 %v1839
  %2712 = vmatpush.bf16.msra.mxu0 %v1832
  %2713 = vmatpush.bf16.msra.mxu0 %v1825
  %2714 = vmatpush.bf16.msra.mxu0 %v1818
  %2715 = vmatpush.bf16.msra.mxu0 %v1811
  %2716 = vmatpush.bf16.msra.mxu0 %v1804
  %2717 = vmatpush.bf16.msra.mxu0 %v1797
  %2718 = vmatpush.bf16.msra.mxu0 %v1790
  %2719 = vmatmul.bf16.gmra.mxu0 %v487
  %v2720 = vpop.f32.mrf.mxu0
  %v2721 = vadd.f32 %v2708, %v2720
  %v2722 = vpop.f32.mrf.mxu0
  %2723 = vdwg.mxu0
  %2724 = vmatpush.bf16.msra.mxu0 %v1895
  %2725 = vmatpush.bf16.msra.mxu0 %v1888
  %2726 = vmatpush.bf16.msra.mxu0 %v1881
  %2727 = vmatpush.bf16.msra.mxu0 %v1874
  %2728 = vmatpush.bf16.msra.mxu0 %v1867
  %2729 = vmatpush.bf16.msra.mxu0 %v1860
  %2730 = vmatpush.bf16.msra.mxu0 %v1853
  %2731 = vmatpush.bf16.msra.mxu0 %v1846
  %2732 = vmatmul.bf16.gmra.mxu0 %v488
  %v2733 = vpop.f32.mrf.mxu0
  %v2734 = vadd.f32 %v2721, %v2733
  %v2735 = vpop.f32.mrf.mxu0
  %2736 = vdwg.mxu0
  %2737 = vmatpush.bf16.msra.mxu0 %v1951
  %2738 = vmatpush.bf16.msra.mxu0 %v1944
  %2739 = vmatpush.bf16.msra.mxu0 %v1937
  %2740 = vmatpush.bf16.msra.mxu0 %v1930
  %2741 = vmatpush.bf16.msra.mxu0 %v1923
  %2742 = vmatpush.bf16.msra.mxu0 %v1916
  %2743 = vmatpush.bf16.msra.mxu0 %v1909
  %2744 = vmatpush.bf16.msra.mxu0 %v1902
  %2745 = vmatmul.bf16.gmra.mxu0 %v489
  %v2746 = vpop.f32.mrf.mxu0
  %v2747 = vadd.f32 %v2734, %v2746
  %v2748 = vpop.f32.mrf.mxu0
  %2749 = vdwg.mxu0
  %2750 = vmatpush.bf16.msra.mxu0 %v2007
  %2751 = vmatpush.bf16.msra.mxu0 %v2000
  %2752 = vmatpush.bf16.msra.mxu0 %v1993
  %2753 = vmatpush.bf16.msra.mxu0 %v1986
  %2754 = vmatpush.bf16.msra.mxu0 %v1979
  %2755 = vmatpush.bf16.msra.mxu0 %v1972
  %2756 = vmatpush.bf16.msra.mxu0 %v1965
  %2757 = vmatpush.bf16.msra.mxu0 %v1958
  %2758 = vmatmul.bf16.gmra.mxu0 %v490
  %v2759 = vpop.f32.mrf.mxu0
  %v2760 = vadd.f32 %v2747, %v2759
  %v2761 = vpop.f32.mrf.mxu0
  %2762 = vdwg.mxu0
  %2763 = vmatpush.bf16.msra.mxu0 %v2063
  %2764 = vmatpush.bf16.msra.mxu0 %v2056
  %2765 = vmatpush.bf16.msra.mxu0 %v2049
  %2766 = vmatpush.bf16.msra.mxu0 %v2042
  %2767 = vmatpush.bf16.msra.mxu0 %v2035
  %2768 = vmatpush.bf16.msra.mxu0 %v2028
  %2769 = vmatpush.bf16.msra.mxu0 %v2021
  %2770 = vmatpush.bf16.msra.mxu0 %v2014
  %2771 = vmatmul.bf16.gmra.mxu0 %v491
  %v2772 = vpop.f32.mrf.mxu0
  %v2773 = vadd.f32 %v2760, %v2772
  %v2774 = vpop.f32.mrf.mxu0
  %2775 = vdwg.mxu0
  %2776 = vmatpush.bf16.msra.mxu0 %v2119
  %2777 = vmatpush.bf16.msra.mxu0 %v2112
  %2778 = vmatpush.bf16.msra.mxu0 %v2105
  %2779 = vmatpush.bf16.msra.mxu0 %v2098
  %2780 = vmatpush.bf16.msra.mxu0 %v2091
  %2781 = vmatpush.bf16.msra.mxu0 %v2084
  %2782 = vmatpush.bf16.msra.mxu0 %v2077
  %2783 = vmatpush.bf16.msra.mxu0 %v2070
  %2784 = vmatmul.bf16.gmra.mxu0 %v492
  %v2785 = vpop.f32.mrf.mxu0
  %v2786 = vadd.f32 %v2773, %v2785
  %v2787 = vpop.f32.mrf.mxu0
  %2788 = vdwg.mxu0
  %2789 = vmatpush.bf16.msra.mxu0 %v1784
  %2790 = vmatpush.bf16.msra.mxu0 %v1777
  %2791 = vmatpush.bf16.msra.mxu0 %v1770
  %2792 = vmatpush.bf16.msra.mxu0 %v1763
  %2793 = vmatpush.bf16.msra.mxu0 %v1756
  %2794 = vmatpush.bf16.msra.mxu0 %v1749
  %2795 = vmatpush.bf16.msra.mxu0 %v1742
  %2796 = vmatpush.bf16.msra.mxu0 %v1735
  %2797 = vmatmul.bf16.gmra.mxu0 %v486
  %v2798 = vpop.f32.mrf.mxu0
  %v2799 = vadd.f32 %v474, %v2798
  %v2800 = vpop.f32.mrf.mxu0
  %2801 = vdwg.mxu0
  %2802 = vmatpush.bf16.msra.mxu0 %v1840
  %2803 = vmatpush.bf16.msra.mxu0 %v1833
  %2804 = vmatpush.bf16.msra.mxu0 %v1826
  %2805 = vmatpush.bf16.msra.mxu0 %v1819
  %2806 = vmatpush.bf16.msra.mxu0 %v1812
  %2807 = vmatpush.bf16.msra.mxu0 %v1805
  %2808 = vmatpush.bf16.msra.mxu0 %v1798
  %2809 = vmatpush.bf16.msra.mxu0 %v1791
  %2810 = vmatmul.bf16.gmra.mxu0 %v487
  %v2811 = vpop.f32.mrf.mxu0
  %v2812 = vadd.f32 %v2799, %v2811
  %v2813 = vpop.f32.mrf.mxu0
  %2814 = vdwg.mxu0
  %2815 = vmatpush.bf16.msra.mxu0 %v1896
  %2816 = vmatpush.bf16.msra.mxu0 %v1889
  %2817 = vmatpush.bf16.msra.mxu0 %v1882
  %2818 = vmatpush.bf16.msra.mxu0 %v1875
  %2819 = vmatpush.bf16.msra.mxu0 %v1868
  %2820 = vmatpush.bf16.msra.mxu0 %v1861
  %2821 = vmatpush.bf16.msra.mxu0 %v1854
  %2822 = vmatpush.bf16.msra.mxu0 %v1847
  %2823 = vmatmul.bf16.gmra.mxu0 %v488
  %v2824 = vpop.f32.mrf.mxu0
  %v2825 = vadd.f32 %v2812, %v2824
  %v2826 = vpop.f32.mrf.mxu0
  %2827 = vdwg.mxu0
  %2828 = vmatpush.bf16.msra.mxu0 %v1952
  %2829 = vmatpush.bf16.msra.mxu0 %v1945
  %2830 = vmatpush.bf16.msra.mxu0 %v1938
  %2831 = vmatpush.bf16.msra.mxu0 %v1931
  %2832 = vmatpush.bf16.msra.mxu0 %v1924
  %2833 = vmatpush.bf16.msra.mxu0 %v1917
  %2834 = vmatpush.bf16.msra.mxu0 %v1910
  %2835 = vmatpush.bf16.msra.mxu0 %v1903
  %2836 = vmatmul.bf16.gmra.mxu0 %v489
  %v2837 = vpop.f32.mrf.mxu0
  %v2838 = vadd.f32 %v2825, %v2837
  %v2839 = vpop.f32.mrf.mxu0
  %2840 = vdwg.mxu0
  %2841 = vmatpush.bf16.msra.mxu0 %v2008
  %2842 = vmatpush.bf16.msra.mxu0 %v2001
  %2843 = vmatpush.bf16.msra.mxu0 %v1994
  %2844 = vmatpush.bf16.msra.mxu0 %v1987
  %2845 = vmatpush.bf16.msra.mxu0 %v1980
  %2846 = vmatpush.bf16.msra.mxu0 %v1973
  %2847 = vmatpush.bf16.msra.mxu0 %v1966
  %2848 = vmatpush.bf16.msra.mxu0 %v1959
  %2849 = vmatmul.bf16.gmra.mxu0 %v490
  %v2850 = vpop.f32.mrf.mxu0
  %v2851 = vadd.f32 %v2838, %v2850
  %v2852 = vpop.f32.mrf.mxu0
  %2853 = vdwg.mxu0
  %2854 = vmatpush.bf16.msra.mxu0 %v2064
  %2855 = vmatpush.bf16.msra.mxu0 %v2057
  %2856 = vmatpush.bf16.msra.mxu0 %v2050
  %2857 = vmatpush.bf16.msra.mxu0 %v2043
  %2858 = vmatpush.bf16.msra.mxu0 %v2036
  %2859 = vmatpush.bf16.msra.mxu0 %v2029
  %2860 = vmatpush.bf16.msra.mxu0 %v2022
  %2861 = vmatpush.bf16.msra.mxu0 %v2015
  %2862 = vmatmul.bf16.gmra.mxu0 %v491
  %v2863 = vpop.f32.mrf.mxu0
  %v2864 = vadd.f32 %v2851, %v2863
  %v2865 = vpop.f32.mrf.mxu0
  %2866 = vdwg.mxu0
  %2867 = vmatpush.bf16.msra.mxu0 %v2120
  %2868 = vmatpush.bf16.msra.mxu0 %v2113
  %2869 = vmatpush.bf16.msra.mxu0 %v2106
  %2870 = vmatpush.bf16.msra.mxu0 %v2099
  %2871 = vmatpush.bf16.msra.mxu0 %v2092
  %2872 = vmatpush.bf16.msra.mxu0 %v2085
  %2873 = vmatpush.bf16.msra.mxu0 %v2078
  %2874 = vmatpush.bf16.msra.mxu0 %v2071
  %2875 = vmatmul.bf16.gmra.mxu0 %v492
  %v2876 = vpop.f32.mrf.mxu0
  %v2877 = vadd.f32 %v2864, %v2876
  %v2878 = vpop.f32.mrf.mxu0
  %2879 = vdwg.mxu0
  %2880 = vmatpush.bf16.msra.mxu0 %v1785
  %2881 = vmatpush.bf16.msra.mxu0 %v1778
  %2882 = vmatpush.bf16.msra.mxu0 %v1771
  %2883 = vmatpush.bf16.msra.mxu0 %v1764
  %2884 = vmatpush.bf16.msra.mxu0 %v1757
  %2885 = vmatpush.bf16.msra.mxu0 %v1750
  %2886 = vmatpush.bf16.msra.mxu0 %v1743
  %2887 = vmatpush.bf16.msra.mxu0 %v1736
  %2888 = vmatmul.bf16.gmra.mxu0 %v486
  %v2889 = vpop.f32.mrf.mxu0
  %v2890 = vadd.f32 %v474, %v2889
  %v2891 = vpop.f32.mrf.mxu0
  %2892 = vdwg.mxu0
  %2893 = vmatpush.bf16.msra.mxu0 %v1841
  %2894 = vmatpush.bf16.msra.mxu0 %v1834
  %2895 = vmatpush.bf16.msra.mxu0 %v1827
  %2896 = vmatpush.bf16.msra.mxu0 %v1820
  %2897 = vmatpush.bf16.msra.mxu0 %v1813
  %2898 = vmatpush.bf16.msra.mxu0 %v1806
  %2899 = vmatpush.bf16.msra.mxu0 %v1799
  %2900 = vmatpush.bf16.msra.mxu0 %v1792
  %2901 = vmatmul.bf16.gmra.mxu0 %v487
  %v2902 = vpop.f32.mrf.mxu0
  %v2903 = vadd.f32 %v2890, %v2902
  %v2904 = vpop.f32.mrf.mxu0
  %2905 = vdwg.mxu0
  %2906 = vmatpush.bf16.msra.mxu0 %v1897
  %2907 = vmatpush.bf16.msra.mxu0 %v1890
  %2908 = vmatpush.bf16.msra.mxu0 %v1883
  %2909 = vmatpush.bf16.msra.mxu0 %v1876
  %2910 = vmatpush.bf16.msra.mxu0 %v1869
  %2911 = vmatpush.bf16.msra.mxu0 %v1862
  %2912 = vmatpush.bf16.msra.mxu0 %v1855
  %2913 = vmatpush.bf16.msra.mxu0 %v1848
  %2914 = vmatmul.bf16.gmra.mxu0 %v488
  %v2915 = vpop.f32.mrf.mxu0
  %v2916 = vadd.f32 %v2903, %v2915
  %v2917 = vpop.f32.mrf.mxu0
  %2918 = vdwg.mxu0
  %2919 = vmatpush.bf16.msra.mxu0 %v1953
  %2920 = vmatpush.bf16.msra.mxu0 %v1946
  %2921 = vmatpush.bf16.msra.mxu0 %v1939
  %2922 = vmatpush.bf16.msra.mxu0 %v1932
  %2923 = vmatpush.bf16.msra.mxu0 %v1925
  %2924 = vmatpush.bf16.msra.mxu0 %v1918
  %2925 = vmatpush.bf16.msra.mxu0 %v1911
  %2926 = vmatpush.bf16.msra.mxu0 %v1904
  %2927 = vmatmul.bf16.gmra.mxu0 %v489
  %v2928 = vpop.f32.mrf.mxu0
  %v2929 = vadd.f32 %v2916, %v2928
  %v2930 = vpop.f32.mrf.mxu0
  %2931 = vdwg.mxu0
  %2932 = vmatpush.bf16.msra.mxu0 %v2009
  %2933 = vmatpush.bf16.msra.mxu0 %v2002
  %2934 = vmatpush.bf16.msra.mxu0 %v1995
  %2935 = vmatpush.bf16.msra.mxu0 %v1988
  %2936 = vmatpush.bf16.msra.mxu0 %v1981
  %2937 = vmatpush.bf16.msra.mxu0 %v1974
  %2938 = vmatpush.bf16.msra.mxu0 %v1967
  %2939 = vmatpush.bf16.msra.mxu0 %v1960
  %2940 = vmatmul.bf16.gmra.mxu0 %v490
  %v2941 = vpop.f32.mrf.mxu0
  %v2942 = vadd.f32 %v2929, %v2941
  %v2943 = vpop.f32.mrf.mxu0
  %2944 = vdwg.mxu0
  %2945 = vmatpush.bf16.msra.mxu0 %v2065
  %2946 = vmatpush.bf16.msra.mxu0 %v2058
  %2947 = vmatpush.bf16.msra.mxu0 %v2051
  %2948 = vmatpush.bf16.msra.mxu0 %v2044
  %2949 = vmatpush.bf16.msra.mxu0 %v2037
  %2950 = vmatpush.bf16.msra.mxu0 %v2030
  %2951 = vmatpush.bf16.msra.mxu0 %v2023
  %2952 = vmatpush.bf16.msra.mxu0 %v2016
  %2953 = vmatmul.bf16.gmra.mxu0 %v491
  %v2954 = vpop.f32.mrf.mxu0
  %v2955 = vadd.f32 %v2942, %v2954
  %v2956 = vpop.f32.mrf.mxu0
  %2957 = vdwg.mxu0
  %2958 = vmatpush.bf16.msra.mxu0 %v2121
  %2959 = vmatpush.bf16.msra.mxu0 %v2114
  %2960 = vmatpush.bf16.msra.mxu0 %v2107
  %2961 = vmatpush.bf16.msra.mxu0 %v2100
  %2962 = vmatpush.bf16.msra.mxu0 %v2093
  %2963 = vmatpush.bf16.msra.mxu0 %v2086
  %2964 = vmatpush.bf16.msra.mxu0 %v2079
  %2965 = vmatpush.bf16.msra.mxu0 %v2072
  %2966 = vmatmul.bf16.gmra.mxu0 %v492
  %v2967 = vpop.f32.mrf.mxu0
  %v2968 = vadd.f32 %v2955, %v2967
  %v2969 = vpop.f32.mrf.mxu0
  %2970 = vdwg.mxu0
  %2971 = vmatpush.bf16.msra.mxu0 %v1786
  %2972 = vmatpush.bf16.msra.mxu0 %v1779
  %2973 = vmatpush.bf16.msra.mxu0 %v1772
  %2974 = vmatpush.bf16.msra.mxu0 %v1765
  %2975 = vmatpush.bf16.msra.mxu0 %v1758
  %2976 = vmatpush.bf16.msra.mxu0 %v1751
  %2977 = vmatpush.bf16.msra.mxu0 %v1744
  %2978 = vmatpush.bf16.msra.mxu0 %v1737
  %2979 = vmatmul.bf16.gmra.mxu0 %v486
  %v2980 = vpop.f32.mrf.mxu0
  %v2981 = vadd.f32 %v474, %v2980
  %v2982 = vpop.f32.mrf.mxu0
  %2983 = vdwg.mxu0
  %2984 = vmatpush.bf16.msra.mxu0 %v1842
  %2985 = vmatpush.bf16.msra.mxu0 %v1835
  %2986 = vmatpush.bf16.msra.mxu0 %v1828
  %2987 = vmatpush.bf16.msra.mxu0 %v1821
  %2988 = vmatpush.bf16.msra.mxu0 %v1814
  %2989 = vmatpush.bf16.msra.mxu0 %v1807
  %2990 = vmatpush.bf16.msra.mxu0 %v1800
  %2991 = vmatpush.bf16.msra.mxu0 %v1793
  %2992 = vmatmul.bf16.gmra.mxu0 %v487
  %v2993 = vpop.f32.mrf.mxu0
  %v2994 = vadd.f32 %v2981, %v2993
  %v2995 = vpop.f32.mrf.mxu0
  %2996 = vdwg.mxu0
  %2997 = vmatpush.bf16.msra.mxu0 %v1898
  %2998 = vmatpush.bf16.msra.mxu0 %v1891
  %2999 = vmatpush.bf16.msra.mxu0 %v1884
  %3000 = vmatpush.bf16.msra.mxu0 %v1877
  %3001 = vmatpush.bf16.msra.mxu0 %v1870
  %3002 = vmatpush.bf16.msra.mxu0 %v1863
  %3003 = vmatpush.bf16.msra.mxu0 %v1856
  %3004 = vmatpush.bf16.msra.mxu0 %v1849
  %3005 = vmatmul.bf16.gmra.mxu0 %v488
  %v3006 = vpop.f32.mrf.mxu0
  %v3007 = vadd.f32 %v2994, %v3006
  %v3008 = vpop.f32.mrf.mxu0
  %3009 = vdwg.mxu0
  %3010 = vmatpush.bf16.msra.mxu0 %v1954
  %3011 = vmatpush.bf16.msra.mxu0 %v1947
  %3012 = vmatpush.bf16.msra.mxu0 %v1940
  %3013 = vmatpush.bf16.msra.mxu0 %v1933
  %3014 = vmatpush.bf16.msra.mxu0 %v1926
  %3015 = vmatpush.bf16.msra.mxu0 %v1919
  %3016 = vmatpush.bf16.msra.mxu0 %v1912
  %3017 = vmatpush.bf16.msra.mxu0 %v1905
  %3018 = vmatmul.bf16.gmra.mxu0 %v489
  %v3019 = vpop.f32.mrf.mxu0
  %v3020 = vadd.f32 %v3007, %v3019
  %v3021 = vpop.f32.mrf.mxu0
  %3022 = vdwg.mxu0
  %3023 = vmatpush.bf16.msra.mxu0 %v2010
  %3024 = vmatpush.bf16.msra.mxu0 %v2003
  %3025 = vmatpush.bf16.msra.mxu0 %v1996
  %3026 = vmatpush.bf16.msra.mxu0 %v1989
  %3027 = vmatpush.bf16.msra.mxu0 %v1982
  %3028 = vmatpush.bf16.msra.mxu0 %v1975
  %3029 = vmatpush.bf16.msra.mxu0 %v1968
  %3030 = vmatpush.bf16.msra.mxu0 %v1961
  %3031 = vmatmul.bf16.gmra.mxu0 %v490
  %v3032 = vpop.f32.mrf.mxu0
  %v3033 = vadd.f32 %v3020, %v3032
  %v3034 = vpop.f32.mrf.mxu0
  %3035 = vdwg.mxu0
  %3036 = vmatpush.bf16.msra.mxu0 %v2066
  %3037 = vmatpush.bf16.msra.mxu0 %v2059
  %3038 = vmatpush.bf16.msra.mxu0 %v2052
  %3039 = vmatpush.bf16.msra.mxu0 %v2045
  %3040 = vmatpush.bf16.msra.mxu0 %v2038
  %3041 = vmatpush.bf16.msra.mxu0 %v2031
  %3042 = vmatpush.bf16.msra.mxu0 %v2024
  %3043 = vmatpush.bf16.msra.mxu0 %v2017
  %3044 = vmatmul.bf16.gmra.mxu0 %v491
  %v3045 = vpop.f32.mrf.mxu0
  %v3046 = vadd.f32 %v3033, %v3045
  %v3047 = vpop.f32.mrf.mxu0
  %3048 = vdwg.mxu0
  %3049 = vmatpush.bf16.msra.mxu0 %v2122
  %3050 = vmatpush.bf16.msra.mxu0 %v2115
  %3051 = vmatpush.bf16.msra.mxu0 %v2108
  %3052 = vmatpush.bf16.msra.mxu0 %v2101
  %3053 = vmatpush.bf16.msra.mxu0 %v2094
  %3054 = vmatpush.bf16.msra.mxu0 %v2087
  %3055 = vmatpush.bf16.msra.mxu0 %v2080
  %3056 = vmatpush.bf16.msra.mxu0 %v2073
  %3057 = vmatmul.bf16.gmra.mxu0 %v492
  %v3058 = vpop.f32.mrf.mxu0
  %v3059 = vadd.f32 %v3046, %v3058
  %v3060 = vpop.f32.mrf.mxu0
  %3061 = vdwg.mxu0
  %3062 = vmatpush.bf16.msra.mxu0 %v1787
  %3063 = vmatpush.bf16.msra.mxu0 %v1780
  %3064 = vmatpush.bf16.msra.mxu0 %v1773
  %3065 = vmatpush.bf16.msra.mxu0 %v1766
  %3066 = vmatpush.bf16.msra.mxu0 %v1759
  %3067 = vmatpush.bf16.msra.mxu0 %v1752
  %3068 = vmatpush.bf16.msra.mxu0 %v1745
  %3069 = vmatpush.bf16.msra.mxu0 %v1738
  %3070 = vmatmul.bf16.gmra.mxu0 %v486
  %v3071 = vpop.f32.mrf.mxu0
  %v3072 = vadd.f32 %v474, %v3071
  %v3073 = vpop.f32.mrf.mxu0
  %3074 = vdwg.mxu0
  %3075 = vmatpush.bf16.msra.mxu0 %v1843
  %3076 = vmatpush.bf16.msra.mxu0 %v1836
  %3077 = vmatpush.bf16.msra.mxu0 %v1829
  %3078 = vmatpush.bf16.msra.mxu0 %v1822
  %3079 = vmatpush.bf16.msra.mxu0 %v1815
  %3080 = vmatpush.bf16.msra.mxu0 %v1808
  %3081 = vmatpush.bf16.msra.mxu0 %v1801
  %3082 = vmatpush.bf16.msra.mxu0 %v1794
  %3083 = vmatmul.bf16.gmra.mxu0 %v487
  %v3084 = vpop.f32.mrf.mxu0
  %v3085 = vadd.f32 %v3072, %v3084
  %v3086 = vpop.f32.mrf.mxu0
  %3087 = vdwg.mxu0
  %3088 = vmatpush.bf16.msra.mxu0 %v1899
  %3089 = vmatpush.bf16.msra.mxu0 %v1892
  %3090 = vmatpush.bf16.msra.mxu0 %v1885
  %3091 = vmatpush.bf16.msra.mxu0 %v1878
  %3092 = vmatpush.bf16.msra.mxu0 %v1871
  %3093 = vmatpush.bf16.msra.mxu0 %v1864
  %3094 = vmatpush.bf16.msra.mxu0 %v1857
  %3095 = vmatpush.bf16.msra.mxu0 %v1850
  %3096 = vmatmul.bf16.gmra.mxu0 %v488
  %v3097 = vpop.f32.mrf.mxu0
  %v3098 = vadd.f32 %v3085, %v3097
  %v3099 = vpop.f32.mrf.mxu0
  %3100 = vdwg.mxu0
  %3101 = vmatpush.bf16.msra.mxu0 %v1955
  %3102 = vmatpush.bf16.msra.mxu0 %v1948
  %3103 = vmatpush.bf16.msra.mxu0 %v1941
  %3104 = vmatpush.bf16.msra.mxu0 %v1934
  %3105 = vmatpush.bf16.msra.mxu0 %v1927
  %3106 = vmatpush.bf16.msra.mxu0 %v1920
  %3107 = vmatpush.bf16.msra.mxu0 %v1913
  %3108 = vmatpush.bf16.msra.mxu0 %v1906
  %3109 = vmatmul.bf16.gmra.mxu0 %v489
  %v3110 = vpop.f32.mrf.mxu0
  %v3111 = vadd.f32 %v3098, %v3110
  %v3112 = vpop.f32.mrf.mxu0
  %3113 = vdwg.mxu0
  %3114 = vmatpush.bf16.msra.mxu0 %v2011
  %3115 = vmatpush.bf16.msra.mxu0 %v2004
  %3116 = vmatpush.bf16.msra.mxu0 %v1997
  %3117 = vmatpush.bf16.msra.mxu0 %v1990
  %3118 = vmatpush.bf16.msra.mxu0 %v1983
  %3119 = vmatpush.bf16.msra.mxu0 %v1976
  %3120 = vmatpush.bf16.msra.mxu0 %v1969
  %3121 = vmatpush.bf16.msra.mxu0 %v1962
  %3122 = vmatmul.bf16.gmra.mxu0 %v490
  %v3123 = vpop.f32.mrf.mxu0
  %v3124 = vadd.f32 %v3111, %v3123
  %v3125 = vpop.f32.mrf.mxu0
  %3126 = vdwg.mxu0
  %3127 = vmatpush.bf16.msra.mxu0 %v2067
  %3128 = vmatpush.bf16.msra.mxu0 %v2060
  %3129 = vmatpush.bf16.msra.mxu0 %v2053
  %3130 = vmatpush.bf16.msra.mxu0 %v2046
  %3131 = vmatpush.bf16.msra.mxu0 %v2039
  %3132 = vmatpush.bf16.msra.mxu0 %v2032
  %3133 = vmatpush.bf16.msra.mxu0 %v2025
  %3134 = vmatpush.bf16.msra.mxu0 %v2018
  %3135 = vmatmul.bf16.gmra.mxu0 %v491
  %v3136 = vpop.f32.mrf.mxu0
  %v3137 = vadd.f32 %v3124, %v3136
  %v3138 = vpop.f32.mrf.mxu0
  %3139 = vdwg.mxu0
  %3140 = vmatpush.bf16.msra.mxu0 %v2123
  %3141 = vmatpush.bf16.msra.mxu0 %v2116
  %3142 = vmatpush.bf16.msra.mxu0 %v2109
  %3143 = vmatpush.bf16.msra.mxu0 %v2102
  %3144 = vmatpush.bf16.msra.mxu0 %v2095
  %3145 = vmatpush.bf16.msra.mxu0 %v2088
  %3146 = vmatpush.bf16.msra.mxu0 %v2081
  %3147 = vmatpush.bf16.msra.mxu0 %v2074
  %3148 = vmatmul.bf16.gmra.mxu0 %v492
  %v3149 = vpop.f32.mrf.mxu0
  %v3150 = vadd.f32 %v3137, %v3149
  %v3151 = vpop.f32.mrf.mxu0
  %3152 = vdwg.mxu0
  %v3153 = vmax.f32 %v2604, 0.0
  %v3154 = vmax.f32 %v2695, 0.0
  %v3155 = vmax.f32 %v2786, 0.0
  %v3156 = vmax.f32 %v2877, 0.0
  %v3157 = vmax.f32 %v2968, 0.0
  %v3158 = vmax.f32 %v3059, 0.0
  %v3159 = vmax.f32 %v3150, 0.0
  %v3160 = vpack.c.bf16 %v3153, %v3153
  %v3161 = vpack.c.bf16 %v3154, %v3154
  %v3162 = vpack.c.bf16 %v3155, %v3155
  %v3163 = vpack.c.bf16 %v3156, %v3156
  %v3164 = vpack.c.bf16 %v3157, %v3157
  %v3165 = vpack.c.bf16 %v3158, %v3158
  %v3166 = vpack.c.bf16 %v3159, %v3159
  %v3167 = vld [vmem:[%s3] sm:$0xf]
  %v3168 = vld [vmem:[%s3 + $0x4] sm:$0xf]
  %v3169 = vld [vmem:[%s3 + $0x8] sm:$0xf]
  %v3170 = vld [vmem:[%s3 + $0xc] sm:$0xf]
  %v3171 = vld [vmem:[%s3 + $0x10] sm:$0xf]
  %v3172 = vld [vmem:[%s3 + $0x14] sm:$0xf]
  %v3173 = vld [vmem:[%s3 + $0x18] sm:$0xf]
  %v3174 = vld [vmem:[%s3 + $0x1c] sm:$0xf]
  %v3175 = vld [vmem:[%s3 + $0x20] sm:$0xf]
  %v3176 = vld [vmem:[%s3 + $0x24] sm:$0xf]
  %v3177 = vld [vmem:[%s3 + $0x28] sm:$0xf]
  %v3178 = vld [vmem:[%s3 + $0x2c] sm:$0xf]
  %v3179 = vld [vmem:[%s3 + $0x30] sm:$0xf]
  %v3180 = vld [vmem:[%s3 + $0x34] sm:$0xf]
  %v3181 = vld [vmem:[%s3 + $0x38] sm:$0xf]
  %v3182 = vld [vmem:[%s3 + $0x3c] sm:$0xf]
  %v3183 = vld [vmem:[%s3 + $0x40] sm:$0xf]
  %v3184 = vld [vmem:[%s3 + $0x44] sm:$0xf]
  %v3185 = vld [vmem:[%s3 + $0x48] sm:$0xf]
  %v3186 = vld [vmem:[%s3 + $0x4c] sm:$0xf]
  %v3187 = vld [vmem:[%s3 + $0x50] sm:$0xf]
  %v3188 = vld [vmem:[%s3 + $0x54] sm:$0xf]
  %v3189 = vld [vmem:[%s3 + $0x58] sm:$0xf]
  %v3190 = vld [vmem:[%s3 + $0x5c] sm:$0xf]
  %v3191 = vld [vmem:[%s3 + $0x60] sm:$0xf]
  %v3192 = vld [vmem:[%s3 + $0x64] sm:$0xf]
  %v3193 = vld [vmem:[%s3 + $0x68] sm:$0xf]
  %v3194 = vld [vmem:[%s3 + $0x6c] sm:$0xf]
  %v3195 = vld [vmem:[%s3 + $0x70] sm:$0xf]
  %v3196 = vld [vmem:[%s3 + $0x74] sm:$0xf]
  %v3197 = vld [vmem:[%s3 + $0x78] sm:$0xf]
  %v3198 = vld [vmem:[%s3 + $0x7c] sm:$0xf]
  %v3199 = vld [vmem:[%s3 + $0x80] sm:$0xf]
  %v3200 = vld [vmem:[%s3 + $0x84] sm:$0xf]
  %v3201 = vld [vmem:[%s3 + $0x88] sm:$0xf]
  %v3202 = vld [vmem:[%s3 + $0x8c] sm:$0xf]
  %v3203 = vld [vmem:[%s3 + $0x90] sm:$0xf]
  %v3204 = vld [vmem:[%s3 + $0x94] sm:$0xf]
  %v3205 = vld [vmem:[%s3 + $0x98] sm:$0xf]
  %v3206 = vld [vmem:[%s3 + $0x9c] sm:$0xf]
  %v3207 = vld [vmem:[%s3 + $0xa0] sm:$0xf]
  %v3208 = vld [vmem:[%s3 + $0xa4] sm:$0xf]
  %v3209 = vld [vmem:[%s3 + $0xa8] sm:$0xf]
  %v3210 = vld [vmem:[%s3 + $0xac] sm:$0xf]
  %v3211 = vld [vmem:[%s3 + $0xb0] sm:$0xf]
  %v3212 = vld [vmem:[%s3 + $0xb4] sm:$0xf]
  %v3213 = vld [vmem:[%s3 + $0xb8] sm:$0xf]
  %v3214 = vld [vmem:[%s3 + $0xbc] sm:$0xf]
  %v3215 = vld [vmem:[%s3 + $0xc0] sm:$0xf]
  %v3216 = vld [vmem:[%s3 + $0xc4] sm:$0xf]
  %v3217 = vld [vmem:[%s3 + $0xc8] sm:$0xf]
  %v3218 = vld [vmem:[%s3 + $0xcc] sm:$0xf]
  %v3219 = vld [vmem:[%s3 + $0xd0] sm:$0xf]
  %v3220 = vld [vmem:[%s3 + $0xd4] sm:$0xf]
  %v3221 = vld [vmem:[%s3 + $0xd8] sm:$0xf]
  %v3222 = vld [vmem:[%s3 + $0xdc] sm:$0xf]
  %v3223 = vld [vmem:[%s3 + $0xe0] sm:$0xf]
  %v3224 = vld [vmem:[%s3 + $0xe4] sm:$0xf]
  %v3225 = vld [vmem:[%s3 + $0xe8] sm:$0xf]
  %v3226 = vld [vmem:[%s3 + $0xec] sm:$0xf]
  %v3227 = vld [vmem:[%s3 + $0xf0] sm:$0xf]
  %v3228 = vld [vmem:[%s3 + $0xf4] sm:$0xf]
  %v3229 = vld [vmem:[%s3 + $0xf8] sm:$0xf]
  %v3230 = vld [vmem:[%s3 + $0xfc] sm:$0xf]
  %v3231 = vld [vmem:[%s3 + $0x100] sm:$0xf]
  %v3232 = vld [vmem:[%s3 + $0x104] sm:$0xf]
  %v3233 = vld [vmem:[%s3 + $0x108] sm:$0xf]
  %v3234 = vld [vmem:[%s3 + $0x10c] sm:$0xf]
  %v3235 = vld [vmem:[%s3 + $0x110] sm:$0xf]
  %v3236 = vld [vmem:[%s3 + $0x114] sm:$0xf]
  %v3237 = vld [vmem:[%s3 + $0x118] sm:$0xf]
  %v3238 = vld [vmem:[%s3 + $0x11c] sm:$0xf]
  %v3239 = vld [vmem:[%s3 + $0x120] sm:$0xf]
  %v3240 = vld [vmem:[%s3 + $0x124] sm:$0xf]
  %v3241 = vld [vmem:[%s3 + $0x128] sm:$0xf]
  %v3242 = vld [vmem:[%s3 + $0x12c] sm:$0xf]
  %v3243 = vld [vmem:[%s3 + $0x130] sm:$0xf]
  %v3244 = vld [vmem:[%s3 + $0x134] sm:$0xf]
  %v3245 = vld [vmem:[%s3 + $0x138] sm:$0xf]
  %v3246 = vld [vmem:[%s3 + $0x13c] sm:$0xf]
  %v3247 = vld [vmem:[%s3 + $0x140] sm:$0xf]
  %v3248 = vld [vmem:[%s3 + $0x144] sm:$0xf]
  %v3249 = vld [vmem:[%s3 + $0x148] sm:$0xf]
  %v3250 = vld [vmem:[%s3 + $0x14c] sm:$0xf]
  %v3251 = vld [vmem:[%s3 + $0x150] sm:$0xf]
  %v3252 = vld [vmem:[%s3 + $0x154] sm:$0xf]
  %v3253 = vld [vmem:[%s3 + $0x158] sm:$0xf]
  %v3254 = vld [vmem:[%s3 + $0x15c] sm:$0xf]
  %v3255 = vld [vmem:[%s3 + $0x160] sm:$0xf]
  %v3256 = vld [vmem:[%s3 + $0x164] sm:$0xf]
  %v3257 = vld [vmem:[%s3 + $0x168] sm:$0xf]
  %v3258 = vld [vmem:[%s3 + $0x16c] sm:$0xf]
  %v3259 = vld [vmem:[%s3 + $0x170] sm:$0xf]
  %v3260 = vld [vmem:[%s3 + $0x174] sm:$0xf]
  %v3261 = vld [vmem:[%s3 + $0x178] sm:$0xf]
  %v3262 = vld [vmem:[%s3 + $0x17c] sm:$0xf]
  %v3263 = vld [vmem:[%s3 + $0x180] sm:$0xf]
  %v3264 = vld [vmem:[%s3 + $0x184] sm:$0xf]
  %v3265 = vld [vmem:[%s3 + $0x188] sm:$0xf]
  %v3266 = vld [vmem:[%s3 + $0x18c] sm:$0xf]
  %v3267 = vld [vmem:[%s3 + $0x190] sm:$0xf]
  %v3268 = vld [vmem:[%s3 + $0x194] sm:$0xf]
  %v3269 = vld [vmem:[%s3 + $0x198] sm:$0xf]
  %v3270 = vld [vmem:[%s3 + $0x19c] sm:$0xf]
  %v3271 = vld [vmem:[%s3 + $0x1a0] sm:$0xf]
  %v3272 = vld [vmem:[%s3 + $0x1a4] sm:$0xf]
  %v3273 = vld [vmem:[%s3 + $0x1a8] sm:$0xf]
  %v3274 = vld [vmem:[%s3 + $0x1ac] sm:$0xf]
  %v3275 = vld [vmem:[%s3 + $0x1b0] sm:$0xf]
  %v3276 = vld [vmem:[%s3 + $0x1b4] sm:$0xf]
  %v3277 = vld [vmem:[%s3 + $0x1b8] sm:$0xf]
  %v3278 = vld [vmem:[%s3 + $0x1bc] sm:$0xf]
  %v3279 = vld [vmem:[%s4] sm:$0x1]
  %v3281 = vperm.slane %v3279, 0
  %v3395 = vunpack.c.l.b16 %v3167
  %v3396 = vunpack.c.l.b16 %v3168
  %v3397 = vunpack.c.l.b16 %v3169
  %v3398 = vunpack.c.l.b16 %v3170
  %v3399 = vunpack.c.l.b16 %v3171
  %v3400 = vunpack.c.l.b16 %v3172
  %v3401 = vunpack.c.l.b16 %v3173
  %v3402 = vunpack.c.l.b16 %v3174
  %v3403 = vunpack.c.l.b16 %v3175
  %v3404 = vunpack.c.l.b16 %v3176
  %v3405 = vunpack.c.l.b16 %v3177
  %v3406 = vunpack.c.l.b16 %v3178
  %v3407 = vunpack.c.l.b16 %v3179
  %v3408 = vunpack.c.l.b16 %v3180
  %v3409 = vunpack.c.l.b16 %v3181
  %v3410 = vunpack.c.l.b16 %v3182
  %v3411 = vunpack.c.l.b16 %v3183
  %v3412 = vunpack.c.l.b16 %v3184
  %v3413 = vunpack.c.l.b16 %v3185
  %v3414 = vunpack.c.l.b16 %v3186
  %v3415 = vunpack.c.l.b16 %v3187
  %v3416 = vunpack.c.l.b16 %v3188
  %v3417 = vunpack.c.l.b16 %v3189
  %v3418 = vunpack.c.l.b16 %v3190
  %v3419 = vunpack.c.l.b16 %v3191
  %v3420 = vunpack.c.l.b16 %v3192
  %v3421 = vunpack.c.l.b16 %v3193
  %v3422 = vunpack.c.l.b16 %v3194
  %v3423 = vunpack.c.l.b16 %v3195
  %v3424 = vunpack.c.l.b16 %v3196
  %v3425 = vunpack.c.l.b16 %v3197
  %v3426 = vunpack.c.l.b16 %v3198
  %v3427 = vunpack.c.l.b16 %v3199
  %v3428 = vunpack.c.l.b16 %v3200
  %v3429 = vunpack.c.l.b16 %v3201
  %v3430 = vunpack.c.l.b16 %v3202
  %v3431 = vunpack.c.l.b16 %v3203
  %v3432 = vunpack.c.l.b16 %v3204
  %v3433 = vunpack.c.l.b16 %v3205
  %v3434 = vunpack.c.l.b16 %v3206
  %v3435 = vunpack.c.l.b16 %v3207
  %v3436 = vunpack.c.l.b16 %v3208
  %v3437 = vunpack.c.l.b16 %v3209
  %v3438 = vunpack.c.l.b16 %v3210
  %v3439 = vunpack.c.l.b16 %v3211
  %v3440 = vunpack.c.l.b16 %v3212
  %v3441 = vunpack.c.l.b16 %v3213
  %v3442 = vunpack.c.l.b16 %v3214
  %v3443 = vunpack.c.l.b16 %v3215
  %v3444 = vunpack.c.l.b16 %v3216
  %v3445 = vunpack.c.l.b16 %v3217
  %v3446 = vunpack.c.l.b16 %v3218
  %v3447 = vunpack.c.l.b16 %v3219
  %v3448 = vunpack.c.l.b16 %v3220
  %v3449 = vunpack.c.l.b16 %v3221
  %v3450 = vunpack.c.l.b16 %v3222
  %v3451 = vunpack.c.l.b16 %v3223
  %v3452 = vunpack.c.l.b16 %v3224
  %v3453 = vunpack.c.l.b16 %v3225
  %v3454 = vunpack.c.l.b16 %v3226
  %v3455 = vunpack.c.l.b16 %v3227
  %v3456 = vunpack.c.l.b16 %v3228
  %v3457 = vunpack.c.l.b16 %v3229
  %v3458 = vunpack.c.l.b16 %v3230
  %v3459 = vunpack.c.l.b16 %v3231
  %v3460 = vunpack.c.l.b16 %v3232
  %v3461 = vunpack.c.l.b16 %v3233
  %v3462 = vunpack.c.l.b16 %v3234
  %v3463 = vunpack.c.l.b16 %v3235
  %v3464 = vunpack.c.l.b16 %v3236
  %v3465 = vunpack.c.l.b16 %v3237
  %v3466 = vunpack.c.l.b16 %v3238
  %v3467 = vunpack.c.l.b16 %v3239
  %v3468 = vunpack.c.l.b16 %v3240
  %v3469 = vunpack.c.l.b16 %v3241
  %v3470 = vunpack.c.l.b16 %v3242
  %v3471 = vunpack.c.l.b16 %v3243
  %v3472 = vunpack.c.l.b16 %v3244
  %v3473 = vunpack.c.l.b16 %v3245
  %v3474 = vunpack.c.l.b16 %v3246
  %v3475 = vunpack.c.l.b16 %v3247
  %v3476 = vunpack.c.l.b16 %v3248
  %v3477 = vunpack.c.l.b16 %v3249
  %v3478 = vunpack.c.l.b16 %v3250
  %v3479 = vunpack.c.l.b16 %v3251
  %v3480 = vunpack.c.l.b16 %v3252
  %v3481 = vunpack.c.l.b16 %v3253
  %v3482 = vunpack.c.l.b16 %v3254
  %v3483 = vunpack.c.l.b16 %v3255
  %v3484 = vunpack.c.l.b16 %v3256
  %v3485 = vunpack.c.l.b16 %v3257
  %v3486 = vunpack.c.l.b16 %v3258
  %v3487 = vunpack.c.l.b16 %v3259
  %v3488 = vunpack.c.l.b16 %v3260
  %v3489 = vunpack.c.l.b16 %v3261
  %v3490 = vunpack.c.l.b16 %v3262
  %v3491 = vunpack.c.l.b16 %v3263
  %v3492 = vunpack.c.l.b16 %v3264
  %v3493 = vunpack.c.l.b16 %v3265
  %v3494 = vunpack.c.l.b16 %v3266
  %v3495 = vunpack.c.l.b16 %v3267
  %v3496 = vunpack.c.l.b16 %v3268
  %v3497 = vunpack.c.l.b16 %v3269
  %v3498 = vunpack.c.l.b16 %v3270
  %v3499 = vunpack.c.l.b16 %v3271
  %v3500 = vunpack.c.l.b16 %v3272
  %v3501 = vunpack.c.l.b16 %v3273
  %v3502 = vunpack.c.l.b16 %v3274
  %v3503 = vunpack.c.l.b16 %v3275
  %v3504 = vunpack.c.l.b16 %v3276
  %v3505 = vunpack.c.l.b16 %v3277
  %v3506 = vunpack.c.l.b16 %v3278
  %v3507 = vpack.c.b16 %v3396, %v3395
  %v3508 = vpack.c.b16 %v3398, %v3397
  %v3509 = vpack.c.b16 %v3400, %v3399
  %v3510 = vpack.c.b16 %v3402, %v3401
  %v3511 = vpack.c.b16 %v3404, %v3403
  %v3512 = vpack.c.b16 %v3406, %v3405
  %v3513 = vpack.c.b16 %v3408, %v3407
  %v3514 = vpack.c.b16 %v3410, %v3409
  %v3515 = vpack.c.b16 %v3412, %v3411
  %v3516 = vpack.c.b16 %v3414, %v3413
  %v3517 = vpack.c.b16 %v3416, %v3415
  %v3518 = vpack.c.b16 %v3418, %v3417
  %v3519 = vpack.c.b16 %v3420, %v3419
  %v3520 = vpack.c.b16 %v3422, %v3421
  %v3521 = vpack.c.b16 %v3424, %v3423
  %v3522 = vpack.c.b16 %v3426, %v3425
  %v3523 = vpack.c.b16 %v3428, %v3427
  %v3524 = vpack.c.b16 %v3430, %v3429
  %v3525 = vpack.c.b16 %v3432, %v3431
  %v3526 = vpack.c.b16 %v3434, %v3433
  %v3527 = vpack.c.b16 %v3436, %v3435
  %v3528 = vpack.c.b16 %v3438, %v3437
  %v3529 = vpack.c.b16 %v3440, %v3439
  %v3530 = vpack.c.b16 %v3442, %v3441
  %v3531 = vpack.c.b16 %v3444, %v3443
  %v3532 = vpack.c.b16 %v3446, %v3445
  %v3533 = vpack.c.b16 %v3448, %v3447
  %v3534 = vpack.c.b16 %v3450, %v3449
  %v3535 = vpack.c.b16 %v3452, %v3451
  %v3536 = vpack.c.b16 %v3454, %v3453
  %v3537 = vpack.c.b16 %v3456, %v3455
  %v3538 = vpack.c.b16 %v3458, %v3457
  %v3539 = vpack.c.b16 %v3460, %v3459
  %v3540 = vpack.c.b16 %v3462, %v3461
  %v3541 = vpack.c.b16 %v3464, %v3463
  %v3542 = vpack.c.b16 %v3466, %v3465
  %v3543 = vpack.c.b16 %v3468, %v3467
  %v3544 = vpack.c.b16 %v3470, %v3469
  %v3545 = vpack.c.b16 %v3472, %v3471
  %v3546 = vpack.c.b16 %v3474, %v3473
  %v3547 = vpack.c.b16 %v3476, %v3475
  %v3548 = vpack.c.b16 %v3478, %v3477
  %v3549 = vpack.c.b16 %v3480, %v3479
  %v3550 = vpack.c.b16 %v3482, %v3481
  %v3551 = vpack.c.b16 %v3484, %v3483
  %v3552 = vpack.c.b16 %v3486, %v3485
  %v3553 = vpack.c.b16 %v3488, %v3487
  %v3554 = vpack.c.b16 %v3490, %v3489
  %v3555 = vpack.c.b16 %v3492, %v3491
  %v3556 = vpack.c.b16 %v3494, %v3493
  %v3557 = vpack.c.b16 %v3496, %v3495
  %v3558 = vpack.c.b16 %v3498, %v3497
  %v3559 = vpack.c.b16 %v3500, %v3499
  %v3560 = vpack.c.b16 %v3502, %v3501
  %v3561 = vpack.c.b16 %v3504, %v3503
  %v3562 = vpack.c.b16 %v3506, %v3505
  %3619 = vmatpush.bf16.msra.mxu0 %v3514
  %3620 = vmatpush.bf16.msra.mxu0 %v3513
  %3621 = vmatpush.bf16.msra.mxu0 %v3512
  %3622 = vmatpush.bf16.msra.mxu0 %v3511
  %3623 = vmatpush.bf16.msra.mxu0 %v3510
  %3624 = vmatpush.bf16.msra.mxu0 %v3509
  %3625 = vmatpush.bf16.msra.mxu0 %v3508
  %3626 = vmatpush.bf16.msra.mxu0 %v3507
  %3627 = vmatmul.bf16.gmra.mxu0 %v3160
  %v3628 = vpop.f32.mrf.mxu0
  %v3629 = vadd.f32 %v3281, %v3628
  %v3630 = vpop.f32.mrf.mxu0
  %3631 = vdwg.mxu0
  %3632 = vmatpush.bf16.msra.mxu0 %v3522
  %3633 = vmatpush.bf16.msra.mxu0 %v3521
  %3634 = vmatpush.bf16.msra.mxu0 %v3520
  %3635 = vmatpush.bf16.msra.mxu0 %v3519
  %3636 = vmatpush.bf16.msra.mxu0 %v3518
  %3637 = vmatpush.bf16.msra.mxu0 %v3517
  %3638 = vmatpush.bf16.msra.mxu0 %v3516
  %3639 = vmatpush.bf16.msra.mxu0 %v3515
  %3640 = vmatmul.bf16.gmra.mxu0 %v3161
  %v3641 = vpop.f32.mrf.mxu0
  %v3642 = vadd.f32 %v3629, %v3641
  %v3643 = vpop.f32.mrf.mxu0
  %3644 = vdwg.mxu0
  %3645 = vmatpush.bf16.msra.mxu0 %v3530
  %3646 = vmatpush.bf16.msra.mxu0 %v3529
  %3647 = vmatpush.bf16.msra.mxu0 %v3528
  %3648 = vmatpush.bf16.msra.mxu0 %v3527
  %3649 = vmatpush.bf16.msra.mxu0 %v3526
  %3650 = vmatpush.bf16.msra.mxu0 %v3525
  %3651 = vmatpush.bf16.msra.mxu0 %v3524
  %3652 = vmatpush.bf16.msra.mxu0 %v3523
  %3653 = vmatmul.bf16.gmra.mxu0 %v3162
  %v3654 = vpop.f32.mrf.mxu0
  %v3655 = vadd.f32 %v3642, %v3654
  %v3656 = vpop.f32.mrf.mxu0
  %3657 = vdwg.mxu0
  %3658 = vmatpush.bf16.msra.mxu0 %v3538
  %3659 = vmatpush.bf16.msra.mxu0 %v3537
  %3660 = vmatpush.bf16.msra.mxu0 %v3536
  %3661 = vmatpush.bf16.msra.mxu0 %v3535
  %3662 = vmatpush.bf16.msra.mxu0 %v3534
  %3663 = vmatpush.bf16.msra.mxu0 %v3533
  %3664 = vmatpush.bf16.msra.mxu0 %v3532
  %3665 = vmatpush.bf16.msra.mxu0 %v3531
  %3666 = vmatmul.bf16.gmra.mxu0 %v3163
  %v3667 = vpop.f32.mrf.mxu0
  %v3668 = vadd.f32 %v3655, %v3667
  %v3669 = vpop.f32.mrf.mxu0
  %3670 = vdwg.mxu0
  %3671 = vmatpush.bf16.msra.mxu0 %v3546
  %3672 = vmatpush.bf16.msra.mxu0 %v3545
  %3673 = vmatpush.bf16.msra.mxu0 %v3544
  %3674 = vmatpush.bf16.msra.mxu0 %v3543
  %3675 = vmatpush.bf16.msra.mxu0 %v3542
  %3676 = vmatpush.bf16.msra.mxu0 %v3541
  %3677 = vmatpush.bf16.msra.mxu0 %v3540
  %3678 = vmatpush.bf16.msra.mxu0 %v3539
  %3679 = vmatmul.bf16.gmra.mxu0 %v3164
  %v3680 = vpop.f32.mrf.mxu0
  %v3681 = vadd.f32 %v3668, %v3680
  %v3682 = vpop.f32.mrf.mxu0
  %3683 = vdwg.mxu0
  %3684 = vmatpush.bf16.msra.mxu0 %v3554
  %3685 = vmatpush.bf16.msra.mxu0 %v3553
  %3686 = vmatpush.bf16.msra.mxu0 %v3552
  %3687 = vmatpush.bf16.msra.mxu0 %v3551
  %3688 = vmatpush.bf16.msra.mxu0 %v3550
  %3689 = vmatpush.bf16.msra.mxu0 %v3549
  %3690 = vmatpush.bf16.msra.mxu0 %v3548
  %3691 = vmatpush.bf16.msra.mxu0 %v3547
  %3692 = vmatmul.bf16.gmra.mxu0 %v3165
  %v3693 = vpop.f32.mrf.mxu0
  %v3694 = vadd.f32 %v3681, %v3693
  %v3695 = vpop.f32.mrf.mxu0
  %3696 = vdwg.mxu0
  %3697 = vmatpush.bf16.msra.mxu0 %v3562
  %3698 = vmatpush.bf16.msra.mxu0 %v3561
  %3699 = vmatpush.bf16.msra.mxu0 %v3560
  %3700 = vmatpush.bf16.msra.mxu0 %v3559
  %3701 = vmatpush.bf16.msra.mxu0 %v3558
  %3702 = vmatpush.bf16.msra.mxu0 %v3557
  %3703 = vmatpush.bf16.msra.mxu0 %v3556
  %3704 = vmatpush.bf16.msra.mxu0 %v3555
  %3705 = vmatmul.bf16.gmra.mxu0 %v3166
  %v3706 = vpop.f32.mrf.mxu0
  %v3707 = vadd.f32 %v3694, %v3706
  %v3708 = vpop.f32.mrf.mxu0
  %3709 = vdwg.mxu0
  %3710 = vst [vmem:[%s5] sm:$0xff] %v3707
  // Predicated region
  $region22: #{my_model_forward.1} parent=0 // pred_check
    _
  $region23: #{my_model_forward.1} parent=0 // pred_check_branch
    %3712 = sbr.rel (0) target = $region25
  $region24: #{my_model_forward.1} parent=0 // pred_region
    _
  $region25: #{my_model_forward.1} parent=0 // pred_fallthru
    _
  // Predicated region
  $region26: #{my_model_forward.1} parent=0 // pred_check
    _
  $region27: #{my_model_forward.1} parent=0 // pred_check_branch
    %3714 = sbr.rel (0) target = $region29
  $region28: #{my_model_forward.1} parent=0 // pred_region
    _
  $region29: #{my_model_forward.1} parent=0 // pred_fallthru
    _

</llo_original>
